<compile_context>
chip_gen: v7x
topology: tpu7x:2x2x1
jax: 0.10.0
libtpu: 0.0.40
codegen_flags: <defaults>
</compile_context>

<pallas_src>
import math

import jax
import jax.numpy as jnp
from jax.experimental import pallas as pl
from jax.experimental.pallas import tpu as pltpu

HIDDEN_LSTM = 64   # LSTM hidden size from the module definition
VAL_LANES = 128    # lane-dense padded width of the value output


def _critic_kernel(state_ref, w1_ref, b1_ref, w2_ref, b2_ref,
                   wih_ref, whh_ref, bih_ref, bhh_ref,
                   w4_ref, b4_ref, w5_ref, b5_ref,
                   value_ref):
    f32 = jnp.float32
    T = state_ref.shape[0]
    H = HIDDEN_LSTM

    # ---- MLP front-end: linear1 -> relu -> linear2 -> relu ----
    h1 = jnp.maximum(
        jnp.dot(state_ref[...], w1_ref[...], preferred_element_type=f32) + b1_ref[...], 0.0)
    h2 = jnp.maximum(
        jnp.dot(h1, w2_ref[...], preferred_element_type=f32) + b2_ref[...], 0.0)

    # ---- LSTM (1 layer, batch=1, zero initial hidden/cell like nn.LSTM default) ----
    # Input contribution for all timesteps in one matmul; both biases folded in.
    xg = (jnp.dot(h2, wih_ref[...], preferred_element_type=f32)
          + bih_ref[...] + bhh_ref[...])                              # (T, 4H)
    w_hh = whh_ref[...]                                               # load once (H, 4H)

    h = jnp.zeros((1, H), f32)
    c = jnp.zeros((1, H), f32)
    h_rows = []
    for t in range(T):                                                # static unroll, no scratch
        g = xg[t:t + 1, :] + jnp.dot(h, w_hh, preferred_element_type=f32)   # (1, 4H)
        i_g = jax.nn.sigmoid(g[:, 0:H])
        f_g = jax.nn.sigmoid(g[:, H:2 * H])
        g_g = jnp.tanh(g[:, 2 * H:3 * H])
        o_g = jax.nn.sigmoid(g[:, 3 * H:4 * H])
        c = f_g * c + i_g * g_g
        h = o_g * jnp.tanh(c)
        h_rows.append(h)
    hseq = jnp.concatenate(h_rows, axis=0)                            # (T, H), stays in vregs

    # ---- heads: linear4 -> relu, linear5 (lane-padded) -> tanh ----
    h4 = jnp.maximum(
        jnp.dot(hseq, w4_ref[...], preferred_element_type=f32) + b4_ref[...], 0.0)
    # w5/b5 are zero-padded to VAL_LANES columns => one full unmasked (T, 128) store.
    value_ref[...] = jnp.tanh(
        jnp.dot(h4, w5_ref[...], preferred_element_type=f32) + b5_ref[...])


def critic_forward(state, params):
    """Critic forward. `state` is (B, T, state_size) or (T, state_size)."""
    squeeze_batch = (state.ndim == 2)
    if squeeze_batch:
        state = state[None]
    B, T, S = state.shape
    A = params["w5"].shape[1]
    pad_n = max(VAL_LANES, ((A + VAL_LANES - 1) // VAL_LANES) * VAL_LANES)

    # Lane-dense value head: zero-pad columns so the output store is unmasked.
    w5_pad = jnp.zeros((params["w5"].shape[0], pad_n), jnp.float32).at[:, :A].set(params["w5"])
    b5_pad = jnp.zeros((1, pad_n), jnp.float32).at[:, :A].set(params["b5"])

    def full_spec(arr):
        # Whole-array block, constant block index => fetched once, resident across grid steps.
        return pl.BlockSpec(arr.shape, lambda b: (0,) * arr.ndim)

    in_specs = [
        pl.BlockSpec((None, T, S), lambda b: (b, 0, 0)),          # one trajectory per grid step
        full_spec(params["w1"]), full_spec(params["b1"]),
        full_spec(params["w2"]), full_spec(params["b2"]),
        full_spec(params["w_ih"]), full_spec(params["w_hh"]),
        full_spec(params["b_ih"]), full_spec(params["b_hh"]),
        full_spec(params["w4"]), full_spec(params["b4"]),
        full_spec(w5_pad), full_spec(b5_pad),
    ]

    out = pl.pallas_call(
        _critic_kernel,
        out_shape=jax.ShapeDtypeStruct((B, T, pad_n), jnp.float32),
        grid=(B,),
        in_specs=in_specs,
        out_specs=pl.BlockSpec((None, T, pad_n), lambda b: (b, 0, 0)),
        compiler_params=pltpu.CompilerParams(dimension_semantics=("parallel",)),
    )(state,
      params["w1"], params["b1"], params["w2"], params["b2"],
      params["w_ih"], params["w_hh"], params["b_ih"], params["b_hh"],
      params["w4"], params["b4"], w5_pad, b5_pad)

    value = out[:, :, :A]
    if squeeze_batch:
        value = value[0]
    return value


def init_params(key, state_size, action_size):
    """Deterministic PyTorch-style uniform(-1/sqrt(fan_in), +1/sqrt(fan_in)) init."""
    def linear(k, fan_in, fan_out):
        k1, k2 = jax.random.split(k)
        bound = 1.0 / math.sqrt(fan_in)
        w = jax.random.uniform(k1, (fan_in, fan_out), jnp.float32, -bound, bound)
        b = jax.random.uniform(k2, (1, fan_out), jnp.float32, -bound, bound)
        return w, b

    keys = jax.random.split(key, 5)
    w1, b1 = linear(keys[0], state_size, 64)
    w2, b2 = linear(keys[1], 64, 128)

    # LSTM weights, PyTorch gate order (i, f, g, o), stored transposed as (fan_in, 4*hidden).
    bound = 1.0 / math.sqrt(HIDDEN_LSTM)
    kih, khh, kbih, kbhh = jax.random.split(keys[2], 4)
    w_ih = jax.random.uniform(kih, (128, 4 * HIDDEN_LSTM), jnp.float32, -bound, bound)
    w_hh = jax.random.uniform(khh, (HIDDEN_LSTM, 4 * HIDDEN_LSTM), jnp.float32, -bound, bound)
    b_ih = jax.random.uniform(kbih, (1, 4 * HIDDEN_LSTM), jnp.float32, -bound, bound)
    b_hh = jax.random.uniform(kbhh, (1, 4 * HIDDEN_LSTM), jnp.float32, -bound, bound)

    w4, b4 = linear(keys[3], HIDDEN_LSTM, 32)
    w5, b5 = linear(keys[4], 32, action_size)

    return dict(w1=w1, b1=b1, w2=w2, b2=b2,
                w_ih=w_ih, w_hh=w_hh, b_ih=b_ih, b_hh=b_hh,
                w4=w4, b4=b4, w5=w5, b5=b5)


if __name__ == "__main__":
    key = jax.random.PRNGKey(0)
    k_params, k_state = jax.random.split(key)

    state_size, action_size, B, T = 16, 2, 2, 8
    params = init_params(k_params, state_size, action_size)
    state = jax.random.normal(k_state, (B, T, state_size), jnp.float32)

    value = critic_forward(state, params)
    jax.block_until_ready(value)

    assert value.shape == (B, T, action_size)
    assert bool(jnp.all(jnp.isfinite(value)))
    print("KERNEL_OK")
</pallas_src>

<mosaic_0001>
module attributes {stable_mosaic.version = 11 : i64} {
  func.func @_critic_kernel(%arg0: i32, %arg1: memref<1x8x16xf32, #tpu.memory_space<vmem>>, %arg2: memref<16x64xf32, #tpu.memory_space<vmem>>, %arg3: memref<1x64xf32, #tpu.memory_space<vmem>>, %arg4: memref<64x128xf32, #tpu.memory_space<vmem>>, %arg5: memref<1x128xf32, #tpu.memory_space<vmem>>, %arg6: memref<128x256xf32, #tpu.memory_space<vmem>>, %arg7: memref<64x256xf32, #tpu.memory_space<vmem>>, %arg8: memref<1x256xf32, #tpu.memory_space<vmem>>, %arg9: memref<1x256xf32, #tpu.memory_space<vmem>>, %arg10: memref<64x32xf32, #tpu.memory_space<vmem>>, %arg11: memref<1x32xf32, #tpu.memory_space<vmem>>, %arg12: memref<32x128xf32, #tpu.memory_space<vmem>>, %arg13: memref<1x128xf32, #tpu.memory_space<vmem>>, %arg14: memref<1x8x128xf32, #tpu.memory_space<vmem>>) attributes {dimension_semantics = [#tpu.dimension_semantics<parallel>], iteration_bounds = array<i64: 2>, scalar_prefetch = 0 : i64, scratch_operands = 0 : i64, tpu.core_type = #tpu.core_type<tc>, window_params = [{transform_indices = @transform_0, window_bounds = array<i64: 1, 8, 16>}, {pipeline_mode = #tpu.pipeline_mode<synchronous>, transform_indices = @transform_1, window_bounds = array<i64: 16, 64>}, {pipeline_mode = #tpu.pipeline_mode<synchronous>, transform_indices = @transform_2, window_bounds = array<i64: 1, 64>}, {pipeline_mode = #tpu.pipeline_mode<synchronous>, transform_indices = @transform_3, window_bounds = array<i64: 64, 128>}, {pipeline_mode = #tpu.pipeline_mode<synchronous>, transform_indices = @transform_4, window_bounds = array<i64: 1, 128>}, {pipeline_mode = #tpu.pipeline_mode<synchronous>, transform_indices = @transform_5, window_bounds = array<i64: 128, 256>}, {pipeline_mode = #tpu.pipeline_mode<synchronous>, transform_indices = @transform_6, window_bounds = array<i64: 64, 256>}, {pipeline_mode = #tpu.pipeline_mode<synchronous>, transform_indices = @transform_7, window_bounds = array<i64: 1, 256>}, {pipeline_mode = #tpu.pipeline_mode<synchronous>, transform_indices = @transform_8, window_bounds = array<i64: 1, 256>}, {pipeline_mode = #tpu.pipeline_mode<synchronous>, transform_indices = @transform_9, window_bounds = array<i64: 64, 32>}, {pipeline_mode = #tpu.pipeline_mode<synchronous>, transform_indices = @transform_10, window_bounds = array<i64: 1, 32>}, {pipeline_mode = #tpu.pipeline_mode<synchronous>, transform_indices = @transform_11, window_bounds = array<i64: 32, 128>}, {pipeline_mode = #tpu.pipeline_mode<synchronous>, transform_indices = @transform_12, window_bounds = array<i64: 1, 128>}, {transform_indices = @transform_13, window_bounds = array<i64: 1, 8, 128>}]} {
    %c0 = arith.constant 0 : index
    %c0_0 = arith.constant 0 : index
    %c0_1 = arith.constant 0 : index
    %0 = vector.load %arg1[%c0, %c0_0, %c0_1] : memref<1x8x16xf32, #tpu.memory_space<vmem>>, vector<1x8x16xf32>
    %1 = vector.shape_cast %0 : vector<1x8x16xf32> to vector<8x16xf32>
    %c0_2 = arith.constant 0 : index
    %c0_3 = arith.constant 0 : index
    %2 = vector.load %arg2[%c0_2, %c0_3] : memref<16x64xf32, #tpu.memory_space<vmem>>, vector<16x64xf32>
    %cst = arith.constant dense<0.000000e+00> : vector<8x64xf32>
    %3 = tpu.matmul %1, %2, %cst {dimension_numbers = #tpu.dot_dimension_numbers<[1], [0], [0], [1], [0, 0, 1, 1], [], []>} : vector<8x16xf32>, vector<16x64xf32>, vector<8x64xf32> -> vector<8x64xf32>
    %c0_4 = arith.constant 0 : index
    %c0_5 = arith.constant 0 : index
    %4 = vector.load %arg3[%c0_4, %c0_5] : memref<1x64xf32, #tpu.memory_space<vmem>>, vector<1x64xf32>
    %5 = vector.broadcast %4 : vector<1x64xf32> to vector<8x64xf32>
    %6 = arith.addf %3, %5 : vector<8x64xf32>
    %cst_6 = arith.constant 0.000000e+00 : f32
    %7 = vector.broadcast %cst_6 : f32 to vector<8x64xf32>
    %8 = arith.maximumf %6, %7 : vector<8x64xf32>
    %c0_7 = arith.constant 0 : index
    %c0_8 = arith.constant 0 : index
    %9 = vector.load %arg4[%c0_7, %c0_8] : memref<64x128xf32, #tpu.memory_space<vmem>>, vector<64x128xf32>
    %cst_9 = arith.constant dense<0.000000e+00> : vector<8x128xf32>
    %10 = tpu.matmul %8, %9, %cst_9 {dimension_numbers = #tpu.dot_dimension_numbers<[1], [0], [0], [1], [0, 0, 1, 1], [], []>} : vector<8x64xf32>, vector<64x128xf32>, vector<8x128xf32> -> vector<8x128xf32>
    %c0_10 = arith.constant 0 : index
    %c0_11 = arith.constant 0 : index
    %11 = vector.load %arg5[%c0_10, %c0_11] : memref<1x128xf32, #tpu.memory_space<vmem>>, vector<1x128xf32>
    %12 = vector.broadcast %11 : vector<1x128xf32> to vector<8x128xf32>
    %13 = arith.addf %10, %12 : vector<8x128xf32>
    %cst_12 = arith.constant 0.000000e+00 : f32
    %14 = vector.broadcast %cst_12 : f32 to vector<8x128xf32>
    %15 = arith.maximumf %13, %14 : vector<8x128xf32>
    %c0_13 = arith.constant 0 : index
    %c0_14 = arith.constant 0 : index
    %16 = vector.load %arg6[%c0_13, %c0_14] : memref<128x256xf32, #tpu.memory_space<vmem>>, vector<128x256xf32>
    %cst_15 = arith.constant dense<0.000000e+00> : vector<8x256xf32>
    %17 = tpu.matmul %15, %16, %cst_15 {dimension_numbers = #tpu.dot_dimension_numbers<[1], [0], [0], [1], [0, 0, 1, 1], [], []>} : vector<8x128xf32>, vector<128x256xf32>, vector<8x256xf32> -> vector<8x256xf32>
    %c0_16 = arith.constant 0 : index
    %c0_17 = arith.constant 0 : index
    %18 = vector.load %arg8[%c0_16, %c0_17] : memref<1x256xf32, #tpu.memory_space<vmem>>, vector<1x256xf32>
    %19 = vector.broadcast %18 : vector<1x256xf32> to vector<8x256xf32>
    %20 = arith.addf %17, %19 : vector<8x256xf32>
    %c0_18 = arith.constant 0 : index
    %c0_19 = arith.constant 0 : index
    %21 = vector.load %arg9[%c0_18, %c0_19] : memref<1x256xf32, #tpu.memory_space<vmem>>, vector<1x256xf32>
    %22 = vector.broadcast %21 : vector<1x256xf32> to vector<8x256xf32>
    %23 = arith.addf %20, %22 : vector<8x256xf32>
    %c0_20 = arith.constant 0 : index
    %c0_21 = arith.constant 0 : index
    %24 = vector.load %arg7[%c0_20, %c0_21] : memref<64x256xf32, #tpu.memory_space<vmem>>, vector<64x256xf32>
    %cst_22 = arith.constant 0.000000e+00 : f32
    %25 = vector.broadcast %cst_22 : f32 to vector<1x64xf32>
    %cst_23 = arith.constant 0.000000e+00 : f32
    %26 = vector.broadcast %cst_23 : f32 to vector<1x64xf32>
    %27 = vector.extract_strided_slice %23 {offsets = [0, 0], sizes = [1, 256], strides = [1, 1]} : vector<8x256xf32> to vector<1x256xf32>
    %cst_24 = arith.constant dense<0.000000e+00> : vector<1x256xf32>
    %28 = tpu.matmul %25, %24, %cst_24 {dimension_numbers = #tpu.dot_dimension_numbers<[1], [0], [0], [1], [0, 0, 1, 1], [], []>} : vector<1x64xf32>, vector<64x256xf32>, vector<1x256xf32> -> vector<1x256xf32>
    %29 = arith.addf %27, %28 : vector<1x256xf32>
    %30 = vector.extract_strided_slice %29 {offsets = [0, 0], sizes = [1, 64], strides = [1, 1]} : vector<1x256xf32> to vector<1x64xf32>
    %31 = arith.negf %30 : vector<1x64xf32>
    %32 = math.exp %31 : vector<1x64xf32>
    %cst_25 = arith.constant 1.000000e+00 : f32
    %33 = vector.broadcast %cst_25 : f32 to vector<1x64xf32>
    %34 = arith.addf %33, %32 : vector<1x64xf32>
    %35 = arith.divf %33, %34 : vector<1x64xf32>
    %36 = vector.extract_strided_slice %29 {offsets = [0, 64], sizes = [1, 64], strides = [1, 1]} : vector<1x256xf32> to vector<1x64xf32>
    %37 = arith.negf %36 : vector<1x64xf32>
    %38 = math.exp %37 : vector<1x64xf32>
    %cst_26 = arith.constant 1.000000e+00 : f32
    %39 = vector.broadcast %cst_26 : f32 to vector<1x64xf32>
    %40 = arith.addf %39, %38 : vector<1x64xf32>
    %41 = arith.divf %39, %40 : vector<1x64xf32>
    %42 = vector.extract_strided_slice %29 {offsets = [0, 128], sizes = [1, 64], strides = [1, 1]} : vector<1x256xf32> to vector<1x64xf32>
    %43 = math.tanh %42 : vector<1x64xf32>
    %44 = vector.extract_strided_slice %29 {offsets = [0, 192], sizes = [1, 64], strides = [1, 1]} : vector<1x256xf32> to vector<1x64xf32>
    %45 = arith.negf %44 : vector<1x64xf32>
    %46 = math.exp %45 : vector<1x64xf32>
    %cst_27 = arith.constant 1.000000e+00 : f32
    %47 = vector.broadcast %cst_27 : f32 to vector<1x64xf32>
    %48 = arith.addf %47, %46 : vector<1x64xf32>
    %49 = arith.divf %47, %48 : vector<1x64xf32>
    %50 = arith.mulf %41, %26 : vector<1x64xf32>
    %51 = arith.mulf %35, %43 : vector<1x64xf32>
    %52 = arith.addf %50, %51 : vector<1x64xf32>
    %53 = math.tanh %52 : vector<1x64xf32>
    %54 = arith.mulf %49, %53 : vector<1x64xf32>
    %55 = vector.extract_strided_slice %23 {offsets = [1, 0], sizes = [1, 256], strides = [1, 1]} : vector<8x256xf32> to vector<1x256xf32>
    %cst_28 = arith.constant dense<0.000000e+00> : vector<1x256xf32>
    %56 = tpu.matmul %54, %24, %cst_28 {dimension_numbers = #tpu.dot_dimension_numbers<[1], [0], [0], [1], [0, 0, 1, 1], [], []>} : vector<1x64xf32>, vector<64x256xf32>, vector<1x256xf32> -> vector<1x256xf32>
    %57 = arith.addf %55, %56 : vector<1x256xf32>
    %58 = vector.extract_strided_slice %57 {offsets = [0, 0], sizes = [1, 64], strides = [1, 1]} : vector<1x256xf32> to vector<1x64xf32>
    %59 = arith.negf %58 : vector<1x64xf32>
    %60 = math.exp %59 : vector<1x64xf32>
    %cst_29 = arith.constant 1.000000e+00 : f32
    %61 = vector.broadcast %cst_29 : f32 to vector<1x64xf32>
    %62 = arith.addf %61, %60 : vector<1x64xf32>
    %63 = arith.divf %61, %62 : vector<1x64xf32>
    %64 = vector.extract_strided_slice %57 {offsets = [0, 64], sizes = [1, 64], strides = [1, 1]} : vector<1x256xf32> to vector<1x64xf32>
    %65 = arith.negf %64 : vector<1x64xf32>
    %66 = math.exp %65 : vector<1x64xf32>
    %cst_30 = arith.constant 1.000000e+00 : f32
    %67 = vector.broadcast %cst_30 : f32 to vector<1x64xf32>
    %68 = arith.addf %67, %66 : vector<1x64xf32>
    %69 = arith.divf %67, %68 : vector<1x64xf32>
    %70 = vector.extract_strided_slice %57 {offsets = [0, 128], sizes = [1, 64], strides = [1, 1]} : vector<1x256xf32> to vector<1x64xf32>
    %71 = math.tanh %70 : vector<1x64xf32>
    %72 = vector.extract_strided_slice %57 {offsets = [0, 192], sizes = [1, 64], strides = [1, 1]} : vector<1x256xf32> to vector<1x64xf32>
    %73 = arith.negf %72 : vector<1x64xf32>
    %74 = math.exp %73 : vector<1x64xf32>
    %cst_31 = arith.constant 1.000000e+00 : f32
    %75 = vector.broadcast %cst_31 : f32 to vector<1x64xf32>
    %76 = arith.addf %75, %74 : vector<1x64xf32>
    %77 = arith.divf %75, %76 : vector<1x64xf32>
    %78 = arith.mulf %69, %52 : vector<1x64xf32>
    %79 = arith.mulf %63, %71 : vector<1x64xf32>
    %80 = arith.addf %78, %79 : vector<1x64xf32>
    %81 = math.tanh %80 : vector<1x64xf32>
    %82 = arith.mulf %77, %81 : vector<1x64xf32>
    %83 = vector.extract_strided_slice %23 {offsets = [2, 0], sizes = [1, 256], strides = [1, 1]} : vector<8x256xf32> to vector<1x256xf32>
    %cst_32 = arith.constant dense<0.000000e+00> : vector<1x256xf32>
    %84 = tpu.matmul %82, %24, %cst_32 {dimension_numbers = #tpu.dot_dimension_numbers<[1], [0], [0], [1], [0, 0, 1, 1], [], []>} : vector<1x64xf32>, vector<64x256xf32>, vector<1x256xf32> -> vector<1x256xf32>
    %85 = arith.addf %83, %84 : vector<1x256xf32>
    %86 = vector.extract_strided_slice %85 {offsets = [0, 0], sizes = [1, 64], strides = [1, 1]} : vector<1x256xf32> to vector<1x64xf32>
    %87 = arith.negf %86 : vector<1x64xf32>
    %88 = math.exp %87 : vector<1x64xf32>
    %cst_33 = arith.constant 1.000000e+00 : f32
    %89 = vector.broadcast %cst_33 : f32 to vector<1x64xf32>
    %90 = arith.addf %89, %88 : vector<1x64xf32>
    %91 = arith.divf %89, %90 : vector<1x64xf32>
    %92 = vector.extract_strided_slice %85 {offsets = [0, 64], sizes = [1, 64], strides = [1, 1]} : vector<1x256xf32> to vector<1x64xf32>
    %93 = arith.negf %92 : vector<1x64xf32>
    %94 = math.exp %93 : vector<1x64xf32>
    %cst_34 = arith.constant 1.000000e+00 : f32
    %95 = vector.broadcast %cst_34 : f32 to vector<1x64xf32>
    %96 = arith.addf %95, %94 : vector<1x64xf32>
    %97 = arith.divf %95, %96 : vector<1x64xf32>
    %98 = vector.extract_strided_slice %85 {offsets = [0, 128], sizes = [1, 64], strides = [1, 1]} : vector<1x256xf32> to vector<1x64xf32>
    %99 = math.tanh %98 : vector<1x64xf32>
    %100 = vector.extract_strided_slice %85 {offsets = [0, 192], sizes = [1, 64], strides = [1, 1]} : vector<1x256xf32> to vector<1x64xf32>
    %101 = arith.negf %100 : vector<1x64xf32>
    %102 = math.exp %101 : vector<1x64xf32>
    %cst_35 = arith.constant 1.000000e+00 : f32
    %103 = vector.broadcast %cst_35 : f32 to vector<1x64xf32>
    %104 = arith.addf %103, %102 : vector<1x64xf32>
    %105 = arith.divf %103, %104 : vector<1x64xf32>
    %106 = arith.mulf %97, %80 : vector<1x64xf32>
    %107 = arith.mulf %91, %99 : vector<1x64xf32>
    %108 = arith.addf %106, %107 : vector<1x64xf32>
    %109 = math.tanh %108 : vector<1x64xf32>
    %110 = arith.mulf %105, %109 : vector<1x64xf32>
    %111 = vector.extract_strided_slice %23 {offsets = [3, 0], sizes = [1, 256], strides = [1, 1]} : vector<8x256xf32> to vector<1x256xf32>
    %cst_36 = arith.constant dense<0.000000e+00> : vector<1x256xf32>
    %112 = tpu.matmul %110, %24, %cst_36 {dimension_numbers = #tpu.dot_dimension_numbers<[1], [0], [0], [1], [0, 0, 1, 1], [], []>} : vector<1x64xf32>, vector<64x256xf32>, vector<1x256xf32> -> vector<1x256xf32>
    %113 = arith.addf %111, %112 : vector<1x256xf32>
    %114 = vector.extract_strided_slice %113 {offsets = [0, 0], sizes = [1, 64], strides = [1, 1]} : vector<1x256xf32> to vector<1x64xf32>
    %115 = arith.negf %114 : vector<1x64xf32>
    %116 = math.exp %115 : vector<1x64xf32>
    %cst_37 = arith.constant 1.000000e+00 : f32
    %117 = vector.broadcast %cst_37 : f32 to vector<1x64xf32>
    %118 = arith.addf %117, %116 : vector<1x64xf32>
    %119 = arith.divf %117, %118 : vector<1x64xf32>
    %120 = vector.extract_strided_slice %113 {offsets = [0, 64], sizes = [1, 64], strides = [1, 1]} : vector<1x256xf32> to vector<1x64xf32>
    %121 = arith.negf %120 : vector<1x64xf32>
    %122 = math.exp %121 : vector<1x64xf32>
    %cst_38 = arith.constant 1.000000e+00 : f32
    %123 = vector.broadcast %cst_38 : f32 to vector<1x64xf32>
    %124 = arith.addf %123, %122 : vector<1x64xf32>
    %125 = arith.divf %123, %124 : vector<1x64xf32>
    %126 = vector.extract_strided_slice %113 {offsets = [0, 128], sizes = [1, 64], strides = [1, 1]} : vector<1x256xf32> to vector<1x64xf32>
    %127 = math.tanh %126 : vector<1x64xf32>
    %128 = vector.extract_strided_slice %113 {offsets = [0, 192], sizes = [1, 64], strides = [1, 1]} : vector<1x256xf32> to vector<1x64xf32>
    %129 = arith.negf %128 : vector<1x64xf32>
    %130 = math.exp %129 : vector<1x64xf32>
    %cst_39 = arith.constant 1.000000e+00 : f32
    %131 = vector.broadcast %cst_39 : f32 to vector<1x64xf32>
    %132 = arith.addf %131, %130 : vector<1x64xf32>
    %133 = arith.divf %131, %132 : vector<1x64xf32>
    %134 = arith.mulf %125, %108 : vector<1x64xf32>
    %135 = arith.mulf %119, %127 : vector<1x64xf32>
    %136 = arith.addf %134, %135 : vector<1x64xf32>
    %137 = math.tanh %136 : vector<1x64xf32>
    %138 = arith.mulf %133, %137 : vector<1x64xf32>
    %139 = vector.extract_strided_slice %23 {offsets = [4, 0], sizes = [1, 256], strides = [1, 1]} : vector<8x256xf32> to vector<1x256xf32>
    %cst_40 = arith.constant dense<0.000000e+00> : vector<1x256xf32>
    %140 = tpu.matmul %138, %24, %cst_40 {dimension_numbers = #tpu.dot_dimension_numbers<[1], [0], [0], [1], [0, 0, 1, 1], [], []>} : vector<1x64xf32>, vector<64x256xf32>, vector<1x256xf32> -> vector<1x256xf32>
    %141 = arith.addf %139, %140 : vector<1x256xf32>
    %142 = vector.extract_strided_slice %141 {offsets = [0, 0], sizes = [1, 64], strides = [1, 1]} : vector<1x256xf32> to vector<1x64xf32>
    %143 = arith.negf %142 : vector<1x64xf32>
    %144 = math.exp %143 : vector<1x64xf32>
    %cst_41 = arith.constant 1.000000e+00 : f32
    %145 = vector.broadcast %cst_41 : f32 to vector<1x64xf32>
    %146 = arith.addf %145, %144 : vector<1x64xf32>
    %147 = arith.divf %145, %146 : vector<1x64xf32>
    %148 = vector.extract_strided_slice %141 {offsets = [0, 64], sizes = [1, 64], strides = [1, 1]} : vector<1x256xf32> to vector<1x64xf32>
    %149 = arith.negf %148 : vector<1x64xf32>
    %150 = math.exp %149 : vector<1x64xf32>
    %cst_42 = arith.constant 1.000000e+00 : f32
    %151 = vector.broadcast %cst_42 : f32 to vector<1x64xf32>
    %152 = arith.addf %151, %150 : vector<1x64xf32>
    %153 = arith.divf %151, %152 : vector<1x64xf32>
    %154 = vector.extract_strided_slice %141 {offsets = [0, 128], sizes = [1, 64], strides = [1, 1]} : vector<1x256xf32> to vector<1x64xf32>
    %155 = math.tanh %154 : vector<1x64xf32>
    %156 = vector.extract_strided_slice %141 {offsets = [0, 192], sizes = [1, 64], strides = [1, 1]} : vector<1x256xf32> to vector<1x64xf32>
    %157 = arith.negf %156 : vector<1x64xf32>
    %158 = math.exp %157 : vector<1x64xf32>
    %cst_43 = arith.constant 1.000000e+00 : f32
    %159 = vector.broadcast %cst_43 : f32 to vector<1x64xf32>
    %160 = arith.addf %159, %158 : vector<1x64xf32>
    %161 = arith.divf %159, %160 : vector<1x64xf32>
    %162 = arith.mulf %153, %136 : vector<1x64xf32>
    %163 = arith.mulf %147, %155 : vector<1x64xf32>
    %164 = arith.addf %162, %163 : vector<1x64xf32>
    %165 = math.tanh %164 : vector<1x64xf32>
    %166 = arith.mulf %161, %165 : vector<1x64xf32>
    %167 = vector.extract_strided_slice %23 {offsets = [5, 0], sizes = [1, 256], strides = [1, 1]} : vector<8x256xf32> to vector<1x256xf32>
    %cst_44 = arith.constant dense<0.000000e+00> : vector<1x256xf32>
    %168 = tpu.matmul %166, %24, %cst_44 {dimension_numbers = #tpu.dot_dimension_numbers<[1], [0], [0], [1], [0, 0, 1, 1], [], []>} : vector<1x64xf32>, vector<64x256xf32>, vector<1x256xf32> -> vector<1x256xf32>
    %169 = arith.addf %167, %168 : vector<1x256xf32>
    %170 = vector.extract_strided_slice %169 {offsets = [0, 0], sizes = [1, 64], strides = [1, 1]} : vector<1x256xf32> to vector<1x64xf32>
    %171 = arith.negf %170 : vector<1x64xf32>
    %172 = math.exp %171 : vector<1x64xf32>
    %cst_45 = arith.constant 1.000000e+00 : f32
    %173 = vector.broadcast %cst_45 : f32 to vector<1x64xf32>
    %174 = arith.addf %173, %172 : vector<1x64xf32>
    %175 = arith.divf %173, %174 : vector<1x64xf32>
    %176 = vector.extract_strided_slice %169 {offsets = [0, 64], sizes = [1, 64], strides = [1, 1]} : vector<1x256xf32> to vector<1x64xf32>
    %177 = arith.negf %176 : vector<1x64xf32>
    %178 = math.exp %177 : vector<1x64xf32>
    %cst_46 = arith.constant 1.000000e+00 : f32
    %179 = vector.broadcast %cst_46 : f32 to vector<1x64xf32>
    %180 = arith.addf %179, %178 : vector<1x64xf32>
    %181 = arith.divf %179, %180 : vector<1x64xf32>
    %182 = vector.extract_strided_slice %169 {offsets = [0, 128], sizes = [1, 64], strides = [1, 1]} : vector<1x256xf32> to vector<1x64xf32>
    %183 = math.tanh %182 : vector<1x64xf32>
    %184 = vector.extract_strided_slice %169 {offsets = [0, 192], sizes = [1, 64], strides = [1, 1]} : vector<1x256xf32> to vector<1x64xf32>
    %185 = arith.negf %184 : vector<1x64xf32>
    %186 = math.exp %185 : vector<1x64xf32>
    %cst_47 = arith.constant 1.000000e+00 : f32
    %187 = vector.broadcast %cst_47 : f32 to vector<1x64xf32>
    %188 = arith.addf %187, %186 : vector<1x64xf32>
    %189 = arith.divf %187, %188 : vector<1x64xf32>
    %190 = arith.mulf %181, %164 : vector<1x64xf32>
    %191 = arith.mulf %175, %183 : vector<1x64xf32>
    %192 = arith.addf %190, %191 : vector<1x64xf32>
    %193 = math.tanh %192 : vector<1x64xf32>
    %194 = arith.mulf %189, %193 : vector<1x64xf32>
    %195 = vector.extract_strided_slice %23 {offsets = [6, 0], sizes = [1, 256], strides = [1, 1]} : vector<8x256xf32> to vector<1x256xf32>
    %cst_48 = arith.constant dense<0.000000e+00> : vector<1x256xf32>
    %196 = tpu.matmul %194, %24, %cst_48 {dimension_numbers = #tpu.dot_dimension_numbers<[1], [0], [0], [1], [0, 0, 1, 1], [], []>} : vector<1x64xf32>, vector<64x256xf32>, vector<1x256xf32> -> vector<1x256xf32>
    %197 = arith.addf %195, %196 : vector<1x256xf32>
    %198 = vector.extract_strided_slice %197 {offsets = [0, 0], sizes = [1, 64], strides = [1, 1]} : vector<1x256xf32> to vector<1x64xf32>
    %199 = arith.negf %198 : vector<1x64xf32>
    %200 = math.exp %199 : vector<1x64xf32>
    %cst_49 = arith.constant 1.000000e+00 : f32
    %201 = vector.broadcast %cst_49 : f32 to vector<1x64xf32>
    %202 = arith.addf %201, %200 : vector<1x64xf32>
    %203 = arith.divf %201, %202 : vector<1x64xf32>
    %204 = vector.extract_strided_slice %197 {offsets = [0, 64], sizes = [1, 64], strides = [1, 1]} : vector<1x256xf32> to vector<1x64xf32>
    %205 = arith.negf %204 : vector<1x64xf32>
    %206 = math.exp %205 : vector<1x64xf32>
    %cst_50 = arith.constant 1.000000e+00 : f32
    %207 = vector.broadcast %cst_50 : f32 to vector<1x64xf32>
    %208 = arith.addf %207, %206 : vector<1x64xf32>
    %209 = arith.divf %207, %208 : vector<1x64xf32>
    %210 = vector.extract_strided_slice %197 {offsets = [0, 128], sizes = [1, 64], strides = [1, 1]} : vector<1x256xf32> to vector<1x64xf32>
    %211 = math.tanh %210 : vector<1x64xf32>
    %212 = vector.extract_strided_slice %197 {offsets = [0, 192], sizes = [1, 64], strides = [1, 1]} : vector<1x256xf32> to vector<1x64xf32>
    %213 = arith.negf %212 : vector<1x64xf32>
    %214 = math.exp %213 : vector<1x64xf32>
    %cst_51 = arith.constant 1.000000e+00 : f32
    %215 = vector.broadcast %cst_51 : f32 to vector<1x64xf32>
    %216 = arith.addf %215, %214 : vector<1x64xf32>
    %217 = arith.divf %215, %216 : vector<1x64xf32>
    %218 = arith.mulf %209, %192 : vector<1x64xf32>
    %219 = arith.mulf %203, %211 : vector<1x64xf32>
    %220 = arith.addf %218, %219 : vector<1x64xf32>
    %221 = math.tanh %220 : vector<1x64xf32>
    %222 = arith.mulf %217, %221 : vector<1x64xf32>
    %223 = vector.extract_strided_slice %23 {offsets = [7, 0], sizes = [1, 256], strides = [1, 1]} : vector<8x256xf32> to vector<1x256xf32>
    %cst_52 = arith.constant dense<0.000000e+00> : vector<1x256xf32>
    %224 = tpu.matmul %222, %24, %cst_52 {dimension_numbers = #tpu.dot_dimension_numbers<[1], [0], [0], [1], [0, 0, 1, 1], [], []>} : vector<1x64xf32>, vector<64x256xf32>, vector<1x256xf32> -> vector<1x256xf32>
    %225 = arith.addf %223, %224 : vector<1x256xf32>
    %226 = vector.extract_strided_slice %225 {offsets = [0, 0], sizes = [1, 64], strides = [1, 1]} : vector<1x256xf32> to vector<1x64xf32>
    %227 = arith.negf %226 : vector<1x64xf32>
    %228 = math.exp %227 : vector<1x64xf32>
    %cst_53 = arith.constant 1.000000e+00 : f32
    %229 = vector.broadcast %cst_53 : f32 to vector<1x64xf32>
    %230 = arith.addf %229, %228 : vector<1x64xf32>
    %231 = arith.divf %229, %230 : vector<1x64xf32>
    %232 = vector.extract_strided_slice %225 {offsets = [0, 64], sizes = [1, 64], strides = [1, 1]} : vector<1x256xf32> to vector<1x64xf32>
    %233 = arith.negf %232 : vector<1x64xf32>
    %234 = math.exp %233 : vector<1x64xf32>
    %cst_54 = arith.constant 1.000000e+00 : f32
    %235 = vector.broadcast %cst_54 : f32 to vector<1x64xf32>
    %236 = arith.addf %235, %234 : vector<1x64xf32>
    %237 = arith.divf %235, %236 : vector<1x64xf32>
    %238 = vector.extract_strided_slice %225 {offsets = [0, 128], sizes = [1, 64], strides = [1, 1]} : vector<1x256xf32> to vector<1x64xf32>
    %239 = math.tanh %238 : vector<1x64xf32>
    %240 = vector.extract_strided_slice %225 {offsets = [0, 192], sizes = [1, 64], strides = [1, 1]} : vector<1x256xf32> to vector<1x64xf32>
    %241 = arith.negf %240 : vector<1x64xf32>
    %242 = math.exp %241 : vector<1x64xf32>
    %cst_55 = arith.constant 1.000000e+00 : f32
    %243 = vector.broadcast %cst_55 : f32 to vector<1x64xf32>
    %244 = arith.addf %243, %242 : vector<1x64xf32>
    %245 = arith.divf %243, %244 : vector<1x64xf32>
    %246 = arith.mulf %237, %220 : vector<1x64xf32>
    %247 = arith.mulf %231, %239 : vector<1x64xf32>
    %248 = arith.addf %246, %247 : vector<1x64xf32>
    %249 = math.tanh %248 : vector<1x64xf32>
    %250 = arith.mulf %245, %249 : vector<1x64xf32>
    %251 = tpu.concatenate %54, %82, %110, %138, %166, %194, %222, %250 in 0 : vector<1x64xf32>, vector<1x64xf32>, vector<1x64xf32>, vector<1x64xf32>, vector<1x64xf32>, vector<1x64xf32>, vector<1x64xf32>, vector<1x64xf32> -> vector<8x64xf32>
    %c0_56 = arith.constant 0 : index
    %c0_57 = arith.constant 0 : index
    %252 = vector.load %arg10[%c0_56, %c0_57] : memref<64x32xf32, #tpu.memory_space<vmem>>, vector<64x32xf32>
    %cst_58 = arith.constant dense<0.000000e+00> : vector<8x32xf32>
    %253 = tpu.matmul %251, %252, %cst_58 {dimension_numbers = #tpu.dot_dimension_numbers<[1], [0], [0], [1], [0, 0, 1, 1], [], []>} : vector<8x64xf32>, vector<64x32xf32>, vector<8x32xf32> -> vector<8x32xf32>
    %c0_59 = arith.constant 0 : index
    %c0_60 = arith.constant 0 : index
    %254 = vector.load %arg11[%c0_59, %c0_60] : memref<1x32xf32, #tpu.memory_space<vmem>>, vector<1x32xf32>
    %255 = vector.broadcast %254 : vector<1x32xf32> to vector<8x32xf32>
    %256 = arith.addf %253, %255 : vector<8x32xf32>
    %cst_61 = arith.constant 0.000000e+00 : f32
    %257 = vector.broadcast %cst_61 : f32 to vector<8x32xf32>
    %258 = arith.maximumf %256, %257 : vector<8x32xf32>
    %c0_62 = arith.constant 0 : index
    %c0_63 = arith.constant 0 : index
    %259 = vector.load %arg12[%c0_62, %c0_63] : memref<32x128xf32, #tpu.memory_space<vmem>>, vector<32x128xf32>
    %cst_64 = arith.constant dense<0.000000e+00> : vector<8x128xf32>
    %260 = tpu.matmul %258, %259, %cst_64 {dimension_numbers = #tpu.dot_dimension_numbers<[1], [0], [0], [1], [0, 0, 1, 1], [], []>} : vector<8x32xf32>, vector<32x128xf32>, vector<8x128xf32> -> vector<8x128xf32>
    %c0_65 = arith.constant 0 : index
    %c0_66 = arith.constant 0 : index
    %261 = vector.load %arg13[%c0_65, %c0_66] : memref<1x128xf32, #tpu.memory_space<vmem>>, vector<1x128xf32>
    %262 = vector.broadcast %261 : vector<1x128xf32> to vector<8x128xf32>
    %263 = arith.addf %260, %262 : vector<8x128xf32>
    %264 = math.tanh %263 : vector<8x128xf32>
    %c0_67 = arith.constant 0 : index
    %c0_68 = arith.constant 0 : index
    %c0_69 = arith.constant 0 : index
    %265 = vector.load %arg14[%c0_67, %c0_68, %c0_69] : memref<1x8x128xf32, #tpu.memory_space<vmem>>, vector<1x8x128xf32>
    %266 = vector.shape_cast %265 : vector<1x8x128xf32> to vector<8x128xf32>
    %267 = vector.shape_cast %264 : vector<8x128xf32> to vector<1x8x128xf32>
    tpu.vector_store %arg14[%c0_67, %c0_68, %c0_69], %267 {strides = array<i32>} : memref<1x8x128xf32, #tpu.memory_space<vmem>>, vector<1x8x128xf32>,
    return
  }
  func.func @transform_0(%arg0: i32) -> (i32, i32, i32) {
    %c0_i32 = arith.constant 0 : i32
    %c0_i32_0 = arith.constant 0 : i32
    %c0_i32_1 = arith.constant 0 : i32
    return %arg0, %c0_i32, %c0_i32_0 : i32, i32, i32
  }
  func.func @transform_1(%arg0: i32) -> (i32, i32) {
    %c0_i32 = arith.constant 0 : i32
    %c0_i32_0 = arith.constant 0 : i32
    %c0_i32_1 = arith.constant 0 : i32
    return %c0_i32, %c0_i32_0 : i32, i32
  }
  func.func @transform_2(%arg0: i32) -> (i32, i32) {
    %c0_i32 = arith.constant 0 : i32
    %c0_i32_0 = arith.constant 0 : i32
    %c0_i32_1 = arith.constant 0 : i32
    return %c0_i32, %c0_i32_0 : i32, i32
  }
  func.func @transform_3(%arg0: i32) -> (i32, i32) {
    %c0_i32 = arith.constant 0 : i32
    %c0_i32_0 = arith.constant 0 : i32
    %c0_i32_1 = arith.constant 0 : i32
    return %c0_i32, %c0_i32_0 : i32, i32
  }
  func.func @transform_4(%arg0: i32) -> (i32, i32) {
    %c0_i32 = arith.constant 0 : i32
    %c0_i32_0 = arith.constant 0 : i32
    %c0_i32_1 = arith.constant 0 : i32
    return %c0_i32, %c0_i32_0 : i32, i32
  }
  func.func @transform_5(%arg0: i32) -> (i32, i32) {
    %c0_i32 = arith.constant 0 : i32
    %c0_i32_0 = arith.constant 0 : i32
    %c0_i32_1 = arith.constant 0 : i32
    return %c0_i32, %c0_i32_0 : i32, i32
  }
  func.func @transform_6(%arg0: i32) -> (i32, i32) {
    %c0_i32 = arith.constant 0 : i32
    %c0_i32_0 = arith.constant 0 : i32
    %c0_i32_1 = arith.constant 0 : i32
    return %c0_i32, %c0_i32_0 : i32, i32
  }
  func.func @transform_7(%arg0: i32) -> (i32, i32) {
    %c0_i32 = arith.constant 0 : i32
    %c0_i32_0 = arith.constant 0 : i32
    %c0_i32_1 = arith.constant 0 : i32
    return %c0_i32, %c0_i32_0 : i32, i32
  }
  func.func @transform_8(%arg0: i32) -> (i32, i32) {
    %c0_i32 = arith.constant 0 : i32
    %c0_i32_0 = arith.constant 0 : i32
    %c0_i32_1 = arith.constant 0 : i32
    return %c0_i32, %c0_i32_0 : i32, i32
  }
  func.func @transform_9(%arg0: i32) -> (i32, i32) {
    %c0_i32 = arith.constant 0 : i32
    %c0_i32_0 = arith.constant 0 : i32
    %c0_i32_1 = arith.constant 0 : i32
    return %c0_i32, %c0_i32_0 : i32, i32
  }
  func.func @transform_10(%arg0: i32) -> (i32, i32) {
    %c0_i32 = arith.constant 0 : i32
    %c0_i32_0 = arith.constant 0 : i32
    %c0_i32_1 = arith.constant 0 : i32
    return %c0_i32, %c0_i32_0 : i32, i32
  }
  func.func @transform_11(%arg0: i32) -> (i32, i32) {
    %c0_i32 = arith.constant 0 : i32
    %c0_i32_0 = arith.constant 0 : i32
    %c0_i32_1 = arith.constant 0 : i32
    return %c0_i32, %c0_i32_0 : i32, i32
  }
  func.func @transform_12(%arg0: i32) -> (i32, i32) {
    %c0_i32 = arith.constant 0 : i32
    %c0_i32_0 = arith.constant 0 : i32
    %c0_i32_1 = arith.constant 0 : i32
    return %c0_i32, %c0_i32_0 : i32, i32
  }
  func.func @transform_13(%arg0: i32) -> (i32, i32, i32) {
    %c0_i32 = arith.constant 0 : i32
    %c0_i32_0 = arith.constant 0 : i32
    %c0_i32_1 = arith.constant 0 : i32
    return %arg0, %c0_i32, %c0_i32_0 : i32, i32, i32
  }
}

</mosaic_0001>

<llo_original>
// kernel: tpu_custom_call.1
$region0: #{tpu_custom_call.1}
  #allocation0 [shape = 'u32[]', space=smem, size = 0x4, offset = 0x4, fixed_abs, tag = 'smem constant byte address 0x4 - core index']
  #allocation1 [shape = 'u32[144,128]{1,0:T(1,128)}', space=vmem, size = 0x12000, scoped, tag = 'internal scratch']
  %s0 = inlined_call_operand.hbm [shape: f32[2,8,16], index: 0, kind: input, shape index: {}]
  %s1 = inlined_call_operand.hbm [shape: f32[16,64], index: 1, kind: input, shape index: {}]
  %s2 = inlined_call_operand.hbm [shape: f32[1,64], index: 2, kind: input, shape index: {}]
  %s3 = inlined_call_operand.vmem [shape: f32[64,128], index: 3, kind: input, shape index: {}]
  %s4 = inlined_call_operand.hbm [shape: f32[1,128], index: 4, kind: input, shape index: {}]
  %s5 = inlined_call_operand.hbm [shape: f32[128,256], index: 5, kind: input, shape index: {}]
  %s6 = inlined_call_operand.hbm [shape: f32[64,256], index: 6, kind: input, shape index: {}]
  %s7 = inlined_call_operand.vmem [shape: f32[1,256], index: 7, kind: input, shape index: {}]
  %s8 = inlined_call_operand.hbm [shape: f32[1,256], index: 8, kind: input, shape index: {}]
  %s9 = inlined_call_operand.vmem [shape: f32[64,32], index: 9, kind: input, shape index: {}]
  %s10 = inlined_call_operand.vmem [shape: f32[1,32], index: 10, kind: input, shape index: {}]
  %s11 = inlined_call_operand.vmem [shape: f32[32,128], index: 11, kind: input, shape index: {}]
  %s12 = inlined_call_operand.vmem [shape: f32[1,128], index: 12, kind: input, shape index: {}]
  %s13 = inlined_call_operand.hbm [shape: f32[2,8,128], index: 13, kind: output, shape index: {}]
  %s14 = sld [smem:[#allocation0]]
  $region113: #{tpu_custom_call.1} parent=0
    _
  %s16 = ssub.s32 1, %s14
  %s17 = scalar_select 0, %s16, %s14
  $region1: #{tpu_custom_call.1} parent=0
    #allocation2 [shape = 'u8[8192]{0}', space=vmem, size = 0x2000, scoped, tag = 'input window, operand 0']
    #allocation3 [shape = 's32[2]{0}', space=sflag, size = 0x8, scoped, tag = 'scoped memory for tpu_custom_call.1']
    #allocation4 [shape = 's32[2]{0}', space=sflag, size = 0x8, scoped, tag = 'scoped memory for tpu_custom_call.1']
    #allocation5 [shape = 'u8[8192]{0}', space=vmem, size = 0x2000, scoped, tag = 'input window, operand 1, single buffered']
    #allocation6 [shape = 's32[1]{0}', space=sflag, size = 0x4, scoped, tag = 'scoped memory for tpu_custom_call.1']
    #allocation7 [shape = 'u8[512]{0}', space=vmem, size = 0x400, scoped, tag = 'input window, operand 2, single buffered']
    #allocation8 [shape = 'u8[512]{0}', space=vmem, size = 0x400, scoped, tag = 'input window, operand 4, single buffered']
    #allocation9 [shape = 's32[1]{0}', space=sflag, size = 0x4, scoped, tag = 'scoped memory for tpu_custom_call.1']
    #allocation10 [shape = 'u8[131072]{0}', space=vmem, size = 0x20000, scoped, tag = 'input window, operand 5, single buffered']
    #allocation11 [shape = 'u8[65536]{0}', space=vmem, size = 0x10000, scoped, tag = 'input window, operand 6, single buffered']
    #allocation12 [shape = 's32[1]{0}', space=sflag, size = 0x4, scoped, tag = 'scoped memory for tpu_custom_call.1']
    #allocation13 [shape = 'u8[1024]{0}', space=vmem, size = 0x400, scoped, tag = 'input window, operand 8, single buffered']
    #allocation14 [shape = 'u8[8192]{0}', space=vmem, size = 0x2000, scoped, tag = 'output window, operand 0']
    %18 = vsyncpa [#allocation3], 0
    %s19 = scalar_lea.sflag [#allocation3], 1
    %20 = vsyncpa %s19, 0
    %21 = vsyncpa [#allocation6], 0
    %22 = vsyncpa [#allocation9], 0
    %23 = vsyncpa [#allocation12], 0
    %24 = vsyncpa [#allocation4], 0
    %s25 = scalar_lea.sflag [#allocation4], 1
    %26 = vsyncpa %s25, 0
    loop: start=0, step=1, limit=4
    $region2: #{tpu_custom_call.1} parent=1 // loop_pre_header
      _
    $region3: #{tpu_custom_call.1} parent=1 // loop_header
      %s28 = sphi 0, %s32
      %p29 = scmp.ge.s32.totalorder %s28, 4
      %s38 = sphi 0, %s40
      %s41 = sphi 0, %s38
      %s42 = sphi 0, %s41
      %s58 = sphi 0, %s42
      %s62 = sphi 0, %s62
      %s64 = sphi 0, %s62
      %s65 = sphi 0, %s64
      %s79 = sphi 0, %s65
      %s83 = sphi 0, %s83
      %s85 = sphi 0, %s83
      %s86 = sphi 0, %s85
      %s100 = sphi 0, %s86
      %s104 = sphi 0, %s104
      %s106 = sphi 0, %s104
      %s107 = sphi 0, %s106
      %s121 = sphi 0, %s107
      %s125 = sphi 0, %s125
      %s127 = sphi 0, %s125
      %s128 = sphi 0, %s127
      %s142 = sphi 0, %s128
      %s146 = sphi 0, %s146
      %s148 = sphi 0, %s146
      %s149 = sphi 0, %s148
      %s163 = sphi 0, %s149
      %s167 = sphi 0, %s167
      %s169 = sphi 0, %s167
      %s170 = sphi 0, %s169
      %s184 = sphi 0, %s170
      %s188 = sphi 0, %s188
      %s190 = sphi 0, %s188
      %s191 = sphi 0, %s190
      %s205 = sphi 0, %s191
      %s209 = sphi 0, %s209
      %s211 = sphi 0, %s209
      %s212 = sphi 0, %s211
      %s226 = sphi 0, %s212
      %s230 = sphi 0, %s230
      %s232 = sphi 0, %s230
      %s233 = sphi 0, %s232
      %s247 = sphi 0, %s233
      %s251 = sphi 0, %s251
      %s253 = sphi 0, %s251
      %s254 = sphi 0, %s253
      %s268 = sphi 0, %s254
      %s272 = sphi 0, %s272
      %s274 = sphi 0, %s272
      %s275 = sphi 0, %s274
      %s289 = sphi 0, %s275
      %s293 = sphi 0, %s293
      %s295 = sphi 0, %s293
      %s296 = sphi 0, %s295
      %s310 = sphi 0, %s296
      %s316 = sphi 0, %s318
      %s319 = sphi 0, %s316
      %s320 = sphi 0, %s319
      %s336 = sphi 0, %s320
    $region4: #{tpu_custom_call.1} parent=1 // loop_header_branch
      %31 = sbr.rel (%p29) target = $region8
    $region5: #{tpu_custom_call.1} parent=1 // loop_body
      %s33 = ssub.s32 %s28, 1
      %s34 = ssub.s32 %s28, 2
      %s35 = sadd.s32 %s28, 1
      %s36 = ssub.s32 %s28, %s35
      %p37 = scmp.eq.s32.totalorder %s36, 0
      %s39 = sadd.s32 %s38, 1
      %s40 = scalar_select %p37, %s38, %s39
      %p43 = pneg %p37
      %p44 = scmp.eq.s32.totalorder %s28, 1
      %p45 = por %p43, %p44
      %p46 = scmp.ne.s32.totalorder %s38, %s41
      %p47 = scmp.eq.s32.totalorder %s28, 0
      %p48 = por %p46, %p47
      %p49 = scmp.ne.s32.totalorder %s38, %s41
      %p50 = scmp.eq.s32.totalorder %s33, 1
      %p51 = por %p49, %p50
      %p52 = scmp.ne.s32.totalorder %s41, %s42
      %p53 = scmp.eq.s32.totalorder %s33, 0
      %p54 = por %p52, %p53
      %p55 = scmp.ne.s32.totalorder %s41, %s42
      %p56 = scmp.eq.s32.totalorder %s34, 1
      %p57 = por %p55, %p56
      %p59 = scmp.ne.s32.totalorder %s42, %s58
      %p60 = scmp.eq.s32.totalorder %s34, 0
      %p61 = por %p59, %p60
      %s63 = sadd.s32 %s62, 1
      %p66 = scmp.eq.s32.totalorder %s28, 1
      %p67 = scmp.ne.s32.totalorder %s62, %s64
      %p68 = scmp.eq.s32.totalorder %s28, 0
      %p69 = por %p67, %p68
      %p70 = scmp.ne.s32.totalorder %s62, %s64
      %p71 = scmp.eq.s32.totalorder %s33, 1
      %p72 = por %p70, %p71
      %p73 = scmp.ne.s32.totalorder %s64, %s65
      %p74 = scmp.eq.s32.totalorder %s33, 0
      %p75 = por %p73, %p74
      %p76 = scmp.ne.s32.totalorder %s64, %s65
      %p77 = scmp.eq.s32.totalorder %s34, 1
      %p78 = por %p76, %p77
      %p80 = scmp.ne.s32.totalorder %s65, %s79
      %p81 = scmp.eq.s32.totalorder %s34, 0
      %p82 = por %p80, %p81
      %s84 = sadd.s32 %s83, 1
      %p87 = scmp.eq.s32.totalorder %s28, 1
      %p88 = scmp.ne.s32.totalorder %s83, %s85
      %p89 = scmp.eq.s32.totalorder %s28, 0
      %p90 = por %p88, %p89
      %p91 = scmp.ne.s32.totalorder %s83, %s85
      %p92 = scmp.eq.s32.totalorder %s33, 1
      %p93 = por %p91, %p92
      %p94 = scmp.ne.s32.totalorder %s85, %s86
      %p95 = scmp.eq.s32.totalorder %s33, 0
      %p96 = por %p94, %p95
      %p97 = scmp.ne.s32.totalorder %s85, %s86
      %p98 = scmp.eq.s32.totalorder %s34, 1
      %p99 = por %p97, %p98
      %p101 = scmp.ne.s32.totalorder %s86, %s100
      %p102 = scmp.eq.s32.totalorder %s34, 0
      %p103 = por %p101, %p102
      %s105 = sadd.s32 %s104, 1
      %p108 = scmp.eq.s32.totalorder %s28, 1
      %p109 = scmp.ne.s32.totalorder %s104, %s106
      %p110 = scmp.eq.s32.totalorder %s28, 0
      %p111 = por %p109, %p110
      %p112 = scmp.ne.s32.totalorder %s104, %s106
      %p113 = scmp.eq.s32.totalorder %s33, 1
      %p114 = por %p112, %p113
      %p115 = scmp.ne.s32.totalorder %s106, %s107
      %p116 = scmp.eq.s32.totalorder %s33, 0
      %p117 = por %p115, %p116
      %p118 = scmp.ne.s32.totalorder %s106, %s107
      %p119 = scmp.eq.s32.totalorder %s34, 1
      %p120 = por %p118, %p119
      %p122 = scmp.ne.s32.totalorder %s107, %s121
      %p123 = scmp.eq.s32.totalorder %s34, 0
      %p124 = por %p122, %p123
      %s126 = sadd.s32 %s125, 1
      %p129 = scmp.eq.s32.totalorder %s28, 1
      %p130 = scmp.ne.s32.totalorder %s125, %s127
      %p131 = scmp.eq.s32.totalorder %s28, 0
      %p132 = por %p130, %p131
      %p133 = scmp.ne.s32.totalorder %s125, %s127
      %p134 = scmp.eq.s32.totalorder %s33, 1
      %p135 = por %p133, %p134
      %p136 = scmp.ne.s32.totalorder %s127, %s128
      %p137 = scmp.eq.s32.totalorder %s33, 0
      %p138 = por %p136, %p137
      %p139 = scmp.ne.s32.totalorder %s127, %s128
      %p140 = scmp.eq.s32.totalorder %s34, 1
      %p141 = por %p139, %p140
      %p143 = scmp.ne.s32.totalorder %s128, %s142
      %p144 = scmp.eq.s32.totalorder %s34, 0
      %p145 = por %p143, %p144
      %s147 = sadd.s32 %s146, 1
      %p150 = scmp.eq.s32.totalorder %s28, 1
      %p151 = scmp.ne.s32.totalorder %s146, %s148
      %p152 = scmp.eq.s32.totalorder %s28, 0
      %p153 = por %p151, %p152
      %p154 = scmp.ne.s32.totalorder %s146, %s148
      %p155 = scmp.eq.s32.totalorder %s33, 1
      %p156 = por %p154, %p155
      %p157 = scmp.ne.s32.totalorder %s148, %s149
      %p158 = scmp.eq.s32.totalorder %s33, 0
      %p159 = por %p157, %p158
      %p160 = scmp.ne.s32.totalorder %s148, %s149
      %p161 = scmp.eq.s32.totalorder %s34, 1
      %p162 = por %p160, %p161
      %p164 = scmp.ne.s32.totalorder %s149, %s163
      %p165 = scmp.eq.s32.totalorder %s34, 0
      %p166 = por %p164, %p165
      %s168 = sadd.s32 %s167, 1
      %p171 = scmp.eq.s32.totalorder %s28, 1
      %p172 = scmp.ne.s32.totalorder %s167, %s169
      %p173 = scmp.eq.s32.totalorder %s28, 0
      %p174 = por %p172, %p173
      %p175 = scmp.ne.s32.totalorder %s167, %s169
      %p176 = scmp.eq.s32.totalorder %s33, 1
      %p177 = por %p175, %p176
      %p178 = scmp.ne.s32.totalorder %s169, %s170
      %p179 = scmp.eq.s32.totalorder %s33, 0
      %p180 = por %p178, %p179
      %p181 = scmp.ne.s32.totalorder %s169, %s170
      %p182 = scmp.eq.s32.totalorder %s34, 1
      %p183 = por %p181, %p182
      %p185 = scmp.ne.s32.totalorder %s170, %s184
      %p186 = scmp.eq.s32.totalorder %s34, 0
      %p187 = por %p185, %p186
      %s189 = sadd.s32 %s188, 1
      %p192 = scmp.eq.s32.totalorder %s28, 1
      %p193 = scmp.ne.s32.totalorder %s188, %s190
      %p194 = scmp.eq.s32.totalorder %s28, 0
      %p195 = por %p193, %p194
      %p196 = scmp.ne.s32.totalorder %s188, %s190
      %p197 = scmp.eq.s32.totalorder %s33, 1
      %p198 = por %p196, %p197
      %p199 = scmp.ne.s32.totalorder %s190, %s191
      %p200 = scmp.eq.s32.totalorder %s33, 0
      %p201 = por %p199, %p200
      %p202 = scmp.ne.s32.totalorder %s190, %s191
      %p203 = scmp.eq.s32.totalorder %s34, 1
      %p204 = por %p202, %p203
      %p206 = scmp.ne.s32.totalorder %s191, %s205
      %p207 = scmp.eq.s32.totalorder %s34, 0
      %p208 = por %p206, %p207
      %s210 = sadd.s32 %s209, 1
      %p213 = scmp.eq.s32.totalorder %s28, 1
      %p214 = scmp.ne.s32.totalorder %s209, %s211
      %p215 = scmp.eq.s32.totalorder %s28, 0
      %p216 = por %p214, %p215
      %p217 = scmp.ne.s32.totalorder %s209, %s211
      %p218 = scmp.eq.s32.totalorder %s33, 1
      %p219 = por %p217, %p218
      %p220 = scmp.ne.s32.totalorder %s211, %s212
      %p221 = scmp.eq.s32.totalorder %s33, 0
      %p222 = por %p220, %p221
      %p223 = scmp.ne.s32.totalorder %s211, %s212
      %p224 = scmp.eq.s32.totalorder %s34, 1
      %p225 = por %p223, %p224
      %p227 = scmp.ne.s32.totalorder %s212, %s226
      %p228 = scmp.eq.s32.totalorder %s34, 0
      %p229 = por %p227, %p228
      %s231 = sadd.s32 %s230, 1
      %p234 = scmp.eq.s32.totalorder %s28, 1
      %p235 = scmp.ne.s32.totalorder %s230, %s232
      %p236 = scmp.eq.s32.totalorder %s28, 0
      %p237 = por %p235, %p236
      %p238 = scmp.ne.s32.totalorder %s230, %s232
      %p239 = scmp.eq.s32.totalorder %s33, 1
      %p240 = por %p238, %p239
      %p241 = scmp.ne.s32.totalorder %s232, %s233
      %p242 = scmp.eq.s32.totalorder %s33, 0
      %p243 = por %p241, %p242
      %p244 = scmp.ne.s32.totalorder %s232, %s233
      %p245 = scmp.eq.s32.totalorder %s34, 1
      %p246 = por %p244, %p245
      %p248 = scmp.ne.s32.totalorder %s233, %s247
      %p249 = scmp.eq.s32.totalorder %s34, 0
      %p250 = por %p248, %p249
      %s252 = sadd.s32 %s251, 1
      %p255 = scmp.eq.s32.totalorder %s28, 1
      %p256 = scmp.ne.s32.totalorder %s251, %s253
      %p257 = scmp.eq.s32.totalorder %s28, 0
      %p258 = por %p256, %p257
      %p259 = scmp.ne.s32.totalorder %s251, %s253
      %p260 = scmp.eq.s32.totalorder %s33, 1
      %p261 = por %p259, %p260
      %p262 = scmp.ne.s32.totalorder %s253, %s254
      %p263 = scmp.eq.s32.totalorder %s33, 0
      %p264 = por %p262, %p263
      %p265 = scmp.ne.s32.totalorder %s253, %s254
      %p266 = scmp.eq.s32.totalorder %s34, 1
      %p267 = por %p265, %p266
      %p269 = scmp.ne.s32.totalorder %s254, %s268
      %p270 = scmp.eq.s32.totalorder %s34, 0
      %p271 = por %p269, %p270
      %s273 = sadd.s32 %s272, 1
      %p276 = scmp.eq.s32.totalorder %s28, 1
      %p277 = scmp.ne.s32.totalorder %s272, %s274
      %p278 = scmp.eq.s32.totalorder %s28, 0
      %p279 = por %p277, %p278
      %p280 = scmp.ne.s32.totalorder %s272, %s274
      %p281 = scmp.eq.s32.totalorder %s33, 1
      %p282 = por %p280, %p281
      %p283 = scmp.ne.s32.totalorder %s274, %s275
      %p284 = scmp.eq.s32.totalorder %s33, 0
      %p285 = por %p283, %p284
      %p286 = scmp.ne.s32.totalorder %s274, %s275
      %p287 = scmp.eq.s32.totalorder %s34, 1
      %p288 = por %p286, %p287
      %p290 = scmp.ne.s32.totalorder %s275, %s289
      %p291 = scmp.eq.s32.totalorder %s34, 0
      %p292 = por %p290, %p291
      %s294 = sadd.s32 %s293, 1
      %p297 = scmp.eq.s32.totalorder %s28, 1
      %p298 = scmp.ne.s32.totalorder %s293, %s295
      %p299 = scmp.eq.s32.totalorder %s28, 0
      %p300 = por %p298, %p299
      %p301 = scmp.ne.s32.totalorder %s293, %s295
      %p302 = scmp.eq.s32.totalorder %s33, 1
      %p303 = por %p301, %p302
      %p304 = scmp.ne.s32.totalorder %s295, %s296
      %p305 = scmp.eq.s32.totalorder %s33, 0
      %p306 = por %p304, %p305
      %p307 = scmp.ne.s32.totalorder %s295, %s296
      %p308 = scmp.eq.s32.totalorder %s34, 1
      %p309 = por %p307, %p308
      %p311 = scmp.ne.s32.totalorder %s296, %s310
      %p312 = scmp.eq.s32.totalorder %s34, 0
      %p313 = por %p311, %p312
      %s314 = ssub.s32 %s28, %s35
      %p315 = scmp.eq.s32.totalorder %s314, 0
      %s317 = sadd.s32 %s316, 1
      %s318 = scalar_select %p315, %s316, %s317
      %p321 = pneg %p315
      %p322 = scmp.eq.s32.totalorder %s28, 1
      %p323 = por %p321, %p322
      %p324 = scmp.ne.s32.totalorder %s316, %s319
      %p325 = scmp.eq.s32.totalorder %s28, 0
      %p326 = por %p324, %p325
      %p327 = scmp.ne.s32.totalorder %s316, %s319
      %p328 = scmp.eq.s32.totalorder %s33, 1
      %p329 = por %p327, %p328
      %p330 = scmp.ne.s32.totalorder %s319, %s320
      %p331 = scmp.eq.s32.totalorder %s33, 0
      %p332 = por %p330, %p331
      %p333 = scmp.ne.s32.totalorder %s319, %s320
      %p334 = scmp.eq.s32.totalorder %s34, 1
      %p335 = por %p333, %p334
      %p337 = scmp.ne.s32.totalorder %s320, %s336
      %p338 = scmp.eq.s32.totalorder %s34, 0
      %p339 = por %p337, %p338
      %p340 = scmp.le.s32.totalorder 1, %s28
      %p341 = scmp.lt.s32.totalorder %s28, 3
      %p342 = pnand %p340, %p341
      %p343 = pneg %p342
      // Predicated region
      $region9: #{tpu_custom_call.1} parent=5 // pred_check
        _
      $region10: #{tpu_custom_call.1} parent=5 // pred_check_branch
        %345 = sbr.rel (%p342) target = $region12
      $region11: #{tpu_custom_call.1} parent=5 // pred_region
        %s346 = ssub.s32 %s28, 1
        // Predicated region
        $region13: #{tpu_custom_call.1} parent=11 // pred_check
          %p347 = pneg %p75
        $region14: #{tpu_custom_call.1} parent=11 // pred_check_branch
          %349 = sbr.rel (%p347) target = $region16
        $region15: #{tpu_custom_call.1} parent=11 // pred_region
          %s351 = ssub.s32 256, 256
          %352 = vsyncadd [#allocation6], %s351
          %s353 = sshll.u32 [#allocation5], 4
          %s354 = int_to_ptr.vmem [resolvable:$true] %s353
          %359 = dma.hbm_to_vmem [thread:$0]  %s1, 256, %s354, [#allocation6], 128, 128, 8
        $region16: #{tpu_custom_call.1} parent=11 // pred_fallthru
          _
        // Predicated region
        $region17: #{tpu_custom_call.1} parent=11 // pred_check
          %p360 = pneg %p96
        $region18: #{tpu_custom_call.1} parent=11 // pred_check_branch
          %362 = sbr.rel (%p360) target = $region20
        $region19: #{tpu_custom_call.1} parent=11 // pred_region
          %s364 = ssub.s32 16, 16
          %365 = vsyncadd [#allocation6], %s364
          %s367 = sshll.u32 [#allocation7], 4
          %s368 = int_to_ptr.vmem [resolvable:$true] %s367
          %370 = dma.hbm_to_vmem [thread:$0]  %s2, 16, %s368, [#allocation6]
        $region20: #{tpu_custom_call.1} parent=11 // pred_fallthru
          _
        // Predicated region
        $region21: #{tpu_custom_call.1} parent=11 // pred_check
          %p371 = pneg %p117
        $region22: #{tpu_custom_call.1} parent=11 // pred_check_branch
          %373 = sbr.rel (%p371) target = $region24
        $region23: #{tpu_custom_call.1} parent=11 // pred_region
          _
        $region24: #{tpu_custom_call.1} parent=11 // pred_fallthru
          _
        // Predicated region
        $region25: #{tpu_custom_call.1} parent=11 // pred_check
          %p374 = pneg %p138
        $region26: #{tpu_custom_call.1} parent=11 // pred_check_branch
          %376 = sbr.rel (%p374) target = $region28
        $region27: #{tpu_custom_call.1} parent=11 // pred_region
          %s378 = ssub.s32 16, 16
          %379 = vsyncadd [#allocation9], %s378
          %s381 = sshll.u32 [#allocation8], 4
          %s382 = int_to_ptr.vmem [resolvable:$true] %s381
          %384 = dma.hbm_to_vmem [thread:$0]  %s4, 16, %s382, [#allocation9]
        $region28: #{tpu_custom_call.1} parent=11 // pred_fallthru
          _
        // Predicated region
        $region29: #{tpu_custom_call.1} parent=11 // pred_check
          %p385 = pneg %p159
        $region30: #{tpu_custom_call.1} parent=11 // pred_check_branch
          %387 = sbr.rel (%p385) target = $region32
        $region31: #{tpu_custom_call.1} parent=11 // pred_region
          %s389 = ssub.s32 4096, 4096
          %390 = vsyncadd [#allocation9], %s389
          %s391 = sshll.u32 [#allocation10], 4
          %s392 = int_to_ptr.vmem [resolvable:$true] %s391
          %397 = dma.hbm_to_vmem [thread:$0]  %s5, 4096, %s392, [#allocation9], 256, 256, 16
        $region32: #{tpu_custom_call.1} parent=11 // pred_fallthru
          _
        // Predicated region
        $region33: #{tpu_custom_call.1} parent=11 // pred_check
          %p398 = pneg %p180
        $region34: #{tpu_custom_call.1} parent=11 // pred_check_branch
          %400 = sbr.rel (%p398) target = $region36
        $region35: #{tpu_custom_call.1} parent=11 // pred_region
          %s402 = ssub.s32 2048, 2048
          %403 = vsyncadd [#allocation12], %s402
          %s404 = sshll.u32 [#allocation11], 4
          %s405 = int_to_ptr.vmem [resolvable:$true] %s404
          %410 = dma.hbm_to_vmem [thread:$0]  %s6, 2048, %s405, [#allocation12], 256, 256, 16
        $region36: #{tpu_custom_call.1} parent=11 // pred_fallthru
          _
        // Predicated region
        $region37: #{tpu_custom_call.1} parent=11 // pred_check
          %p411 = pneg %p201
        $region38: #{tpu_custom_call.1} parent=11 // pred_check_branch
          %413 = sbr.rel (%p411) target = $region40
        $region39: #{tpu_custom_call.1} parent=11 // pred_region
          _
        $region40: #{tpu_custom_call.1} parent=11 // pred_fallthru
          _
        // Predicated region
        $region41: #{tpu_custom_call.1} parent=11 // pred_check
          %p414 = pneg %p222
        $region42: #{tpu_custom_call.1} parent=11 // pred_check_branch
          %416 = sbr.rel (%p414) target = $region44
        $region43: #{tpu_custom_call.1} parent=11 // pred_region
          %s418 = ssub.s32 32, 32
          %419 = vsyncadd [#allocation12], %s418
          %s421 = sshll.u32 [#allocation13], 4
          %s422 = int_to_ptr.vmem [resolvable:$true] %s421
          %424 = dma.hbm_to_vmem [thread:$0]  %s8, 32, %s422, [#allocation12]
        $region44: #{tpu_custom_call.1} parent=11 // pred_fallthru
          _
        // Predicated region
        $region45: #{tpu_custom_call.1} parent=11 // pred_check
          %p425 = pneg %p243
        $region46: #{tpu_custom_call.1} parent=11 // pred_check_branch
          %427 = sbr.rel (%p425) target = $region48
        $region47: #{tpu_custom_call.1} parent=11 // pred_region
          _
        $region48: #{tpu_custom_call.1} parent=11 // pred_fallthru
          _
        // Predicated region
        $region49: #{tpu_custom_call.1} parent=11 // pred_check
          %p428 = pneg %p264
        $region50: #{tpu_custom_call.1} parent=11 // pred_check_branch
          %430 = sbr.rel (%p428) target = $region52
        $region51: #{tpu_custom_call.1} parent=11 // pred_region
          _
        $region52: #{tpu_custom_call.1} parent=11 // pred_fallthru
          _
        // Predicated region
        $region53: #{tpu_custom_call.1} parent=11 // pred_check
          %p431 = pneg %p285
        $region54: #{tpu_custom_call.1} parent=11 // pred_check_branch
          %433 = sbr.rel (%p431) target = $region56
        $region55: #{tpu_custom_call.1} parent=11 // pred_region
          _
        $region56: #{tpu_custom_call.1} parent=11 // pred_fallthru
          _
        // Predicated region
        $region57: #{tpu_custom_call.1} parent=11 // pred_check
          %p434 = pneg %p306
        $region58: #{tpu_custom_call.1} parent=11 // pred_check_branch
          %436 = sbr.rel (%p434) target = $region60
        $region59: #{tpu_custom_call.1} parent=11 // pred_region
          _
        $region60: #{tpu_custom_call.1} parent=11 // pred_fallthru
          _
      $region12: #{tpu_custom_call.1} parent=5 // pred_fallthru
        _
      %p437 = scmp.lt.s32.totalorder %s28, 2
      // Predicated region
      $region61: #{tpu_custom_call.1} parent=5 // pred_check
        %p438 = pneg %p437
      $region62: #{tpu_custom_call.1} parent=5 // pred_check_branch
        %440 = sbr.rel (%p438) target = $region64
      $region63: #{tpu_custom_call.1} parent=5 // pred_region
        // Predicated region
        $region65: #{tpu_custom_call.1} parent=63 // pred_check
          %p441 = pneg %p48
        $region66: #{tpu_custom_call.1} parent=63 // pred_check_branch
          %443 = sbr.rel (%p441) target = $region68
        $region67: #{tpu_custom_call.1} parent=63 // pred_region
          %s444 = sand.u32 %s38, 1
          %s445 = scalar_lea.sflag [#allocation3], %s444
          %s446 = sand.u32 %s38, 1
          %s447 = smul.addr %s446, 8
          %s448 = scalar_lea.vmem [#allocation2], %s447
          %s450 = ssub.s32 128, 128
          %451 = vsyncadd %s445, %s450
          %s452 = smul.addr %s28, 128
          %s453 = scalar_lea.hbm %s0, %s452
          %s455 = sshll.u32 %s448, 4
          %s456 = int_to_ptr.vmem [resolvable:$true] %s455
          %458 = dma.hbm_to_vmem [thread:$0]  %s453, 128, %s456, %s445
        $region68: #{tpu_custom_call.1} parent=63 // pred_fallthru
          _
      $region64: #{tpu_custom_call.1} parent=5 // pred_fallthru
        _
      %p459 = scmp.le.s32.totalorder 1, %s28
      %p460 = scmp.lt.s32.totalorder %s28, 3
      %p461 = pnand %p459, %p460
      %p462 = pneg %p461
      // Predicated region
      $region69: #{tpu_custom_call.1} parent=5 // pred_check
        _
      $region70: #{tpu_custom_call.1} parent=5 // pred_check_branch
        %464 = sbr.rel (%p461) target = $region72
      $region71: #{tpu_custom_call.1} parent=5 // pred_region
        %s465 = ssub.s32 %s28, 1
        %s466 = sand.u32 %s41, 1
        %s467 = scalar_lea.sflag [#allocation3], %s466
        %s468 = sand.u32 %s41, 1
        %s469 = smul.addr %s468, 8
        %s470 = scalar_lea.vmem [#allocation2], %s469
        // Predicated region
        $region73: #{tpu_custom_call.1} parent=71 // pred_check
          %p471 = pneg %p54
        $region74: #{tpu_custom_call.1} parent=71 // pred_check_branch
          %473 = sbr.rel (%p471) target = $region76
        $region75: #{tpu_custom_call.1} parent=71 // pred_region
          %474 = dma.done %s467, 128
        $region76: #{tpu_custom_call.1} parent=71 // pred_fallthru
          _
        // Predicated region
        $region77: #{tpu_custom_call.1} parent=71 // pred_check
          %p475 = pneg %p75
        $region78: #{tpu_custom_call.1} parent=71 // pred_check_branch
          %477 = sbr.rel (%p475) target = $region80
        $region79: #{tpu_custom_call.1} parent=71 // pred_region
          %478 = dma.done [#allocation6], 256
        $region80: #{tpu_custom_call.1} parent=71 // pred_fallthru
          _
        // Predicated region
        $region81: #{tpu_custom_call.1} parent=71 // pred_check
          %p479 = pneg %p96
        $region82: #{tpu_custom_call.1} parent=71 // pred_check_branch
          %481 = sbr.rel (%p479) target = $region84
        $region83: #{tpu_custom_call.1} parent=71 // pred_region
          %482 = dma.done [#allocation6], 16
        $region84: #{tpu_custom_call.1} parent=71 // pred_fallthru
          _
        // Predicated region
        $region85: #{tpu_custom_call.1} parent=71 // pred_check
          %p483 = pneg %p138
        $region86: #{tpu_custom_call.1} parent=71 // pred_check_branch
          %485 = sbr.rel (%p483) target = $region88
        $region87: #{tpu_custom_call.1} parent=71 // pred_region
          %486 = dma.done [#allocation9], 16
        $region88: #{tpu_custom_call.1} parent=71 // pred_fallthru
          _
        // Predicated region
        $region89: #{tpu_custom_call.1} parent=71 // pred_check
          %p487 = pneg %p159
        $region90: #{tpu_custom_call.1} parent=71 // pred_check_branch
          %489 = sbr.rel (%p487) target = $region92
        $region91: #{tpu_custom_call.1} parent=71 // pred_region
          %490 = dma.done [#allocation9], 4096
        $region92: #{tpu_custom_call.1} parent=71 // pred_fallthru
          _
        // Predicated region
        $region93: #{tpu_custom_call.1} parent=71 // pred_check
          %p491 = pneg %p180
        $region94: #{tpu_custom_call.1} parent=71 // pred_check_branch
          %493 = sbr.rel (%p491) target = $region96
        $region95: #{tpu_custom_call.1} parent=71 // pred_region
          %494 = dma.done [#allocation12], 2048
        $region96: #{tpu_custom_call.1} parent=71 // pred_fallthru
          _
        // Predicated region
        $region97: #{tpu_custom_call.1} parent=71 // pred_check
          %p495 = pneg %p222
        $region98: #{tpu_custom_call.1} parent=71 // pred_check_branch
          %497 = sbr.rel (%p495) target = $region100
        $region99: #{tpu_custom_call.1} parent=71 // pred_region
          %498 = dma.done [#allocation12], 32
        $region100: #{tpu_custom_call.1} parent=71 // pred_fallthru
          _
        %s499 = sand.u32 %s41, 1
        %s500 = scalar_lea.sflag [#allocation3], %s499
        %s501 = sand.u32 %s41, 1
        %s502 = smul.addr %s501, 8
        %s503 = scalar_lea.vmem [#allocation2], %s502
        %p504 = pneg %p54
        %p505 = pneg %p51
        %p506 = pneg %p75
        %p507 = pneg %p72
        %p508 = pneg %p96
        %p509 = pneg %p93
        %p510 = pneg %p117
        %p511 = pneg %p114
        %p512 = pneg %p138
        %p513 = pneg %p135
        %p514 = pneg %p159
        %p515 = pneg %p156
        %p516 = pneg %p180
        %p517 = pneg %p177
        %p518 = pneg %p201
        %p519 = pneg %p198
        %p520 = pneg %p222
        %p521 = pneg %p219
        %p522 = pneg %p243
        %p523 = pneg %p240
        %p524 = pneg %p264
        %p525 = pneg %p261
        %p526 = pneg %p285
        %p527 = pneg %p282
        %p528 = pneg %p306
        %p529 = pneg %p303
        %p530 = pneg %p332
        %p531 = pneg %p329
        %s532 = sand.u32 %s319, 1
        %s533 = scalar_lea.sflag [#allocation4], %s532
        %s534 = sand.u32 %s319, 1
        %s535 = smul.addr %s534, 8
        %s536 = scalar_lea.vmem [#allocation14], %s535
        %v537 = vld [vmem:[%s470] sm:$0xff]
        %v538 = vld [vmem:[#allocation5] sm:$0xff]
        %v539 = vld [vmem:[#allocation5 + $0x8] sm:$0xff]
        %v540 = vld [vmem:[#allocation7] sm:$0x1]
        %v542 = vlaneseq
        %v543 = vshrl.u32 %v542, 7
        %v544 = vsub.s32 0, %v543
        %v545 = vrot.slane %v540, %v544
        %vm547 = vcmask 130048
        %v549 = vsel %vm547, %v537, 0
        %551 = vmatprep.subr.mxu0 0.0
        %552 = vmatpush1.msra.mxu0 %v538
        %553 = vmatprep.subr.mxu0 0.0
        %554 = vmatpush1.msra.mxu0 %v539
        %555 = vmatprep.subr.mxu0 0.0
        %556 = vmatpush1.msra.mxu0 0.0
        %557 = vmatprep.subr.mxu0 0.0
        %558 = vmatpush1.msra.mxu0 0.0
        %559 = vmatprep.subr.mxu0 0.0
        %560 = vmatpush1.msra.mxu0 0.0
        %561 = vmatprep.subr.mxu0 0.0
        %562 = vmatpush1.msra.mxu0 0.0
        %563 = vmatprep.subr.mxu0 0.0
        %564 = vmatpush1.msra.mxu0 0.0
        %565 = vmatprep.subr.mxu0 0.0
        %566 = vmatpush1.msra.mxu0 0.0
        %567 = vmatprep.subr.mxu0 0.0
        %568 = vmatpush1.msra.mxu0 0.0
        %569 = vmatprep.subr.mxu0 0.0
        %570 = vmatpush1.msra.mxu0 0.0
        %571 = vmatprep.subr.mxu0 0.0
        %572 = vmatpush1.msra.mxu0 0.0
        %573 = vmatprep.subr.mxu0 0.0
        %574 = vmatpush1.msra.mxu0 0.0
        %575 = vmatprep.subr.mxu0 0.0
        %576 = vmatpush1.msra.mxu0 0.0
        %577 = vmatprep.subr.mxu0 0.0
        %578 = vmatpush1.msra.mxu0 0.0
        %579 = vmatprep.subr.mxu0 0.0
        %580 = vmatpush1.msra.mxu0 0.0
        %581 = vmatprep.subr.mxu0 0.0
        %582 = vmatpush1.msra.mxu0 0.0
        %583 = vmatprep.subr.mxu0 0.0
        %584 = vmatpush1.msra.mxu0 0.0
        %585 = vmatprep.subr.mxu0 0.0
        %586 = vmatpush1.msra.mxu0 0.0
        %587 = vmatprep.subr.mxu0 0.0
        %588 = vmatpush1.msra.mxu0 0.0
        %589 = vmatprep.subr.mxu0 0.0
        %590 = vmatpush1.msra.mxu0 0.0
        %591 = vmatprep.subr.mxu0 0.0
        %592 = vmatpush1.msra.mxu0 0.0
        %593 = vmatprep.subr.mxu0 0.0
        %594 = vmatpush1.msra.mxu0 0.0
        %595 = vmatprep.subr.mxu0 0.0
        %596 = vmatpush1.msra.mxu0 0.0
        %597 = vmatprep.subr.mxu0 0.0
        %598 = vmatpush1.msra.mxu0 0.0
        %599 = vmatprep.subr.mxu0 0.0
        %600 = vmatpush1.msra.mxu0 0.0
        %601 = vmatprep.subr.mxu0 0.0
        %602 = vmatpush1.msra.mxu0 0.0
        %603 = vmatprep.subr.mxu0 0.0
        %604 = vmatpush1.msra.mxu0 0.0
        %605 = vmatprep.subr.mxu0 0.0
        %606 = vmatpush1.msra.mxu0 0.0
        %607 = vmatprep.subr.mxu0 0.0
        %608 = vmatpush1.msra.mxu0 0.0
        %609 = vmatprep.subr.mxu0 0.0
        %610 = vmatpush1.msra.mxu0 0.0
        %611 = vmatprep.subr.mxu0 0.0
        %612 = vmatpush1.msra.mxu0 0.0
        %613 = vmatprep.subr.mxu0 0.0
        %614 = vmatpush1.msra.mxu0 0.0
        %615 = vmatprep.mubr.f32.mxu0 0.0
        %616 = vmatmul.mubr.f32.gmra.mrb[0].mxu0 %v549
        %v617 = vpop.f32.mrb[0].mxu0
        %v618 = vadd.f32 %v545, %v617
        %v619 = vpop.f32.mrb[0].mxu0
        %620 = vdwg.mxu0
        %v621 = vmax.f32 %v618, 0.0
        %v622 = vld [vmem:[%s3] sm:$0xff]
        %v623 = vld [vmem:[%s3 + $0x8] sm:$0xff]
        %v624 = vld [vmem:[%s3 + $0x10] sm:$0xff]
        %v625 = vld [vmem:[%s3 + $0x18] sm:$0xff]
        %v626 = vld [vmem:[%s3 + $0x20] sm:$0xff]
        %v627 = vld [vmem:[%s3 + $0x28] sm:$0xff]
        %v628 = vld [vmem:[%s3 + $0x30] sm:$0xff]
        %v629 = vld [vmem:[%s3 + $0x38] sm:$0xff]
        %v630 = vld [vmem:[#allocation8] sm:$0x1]
        %v632 = vlaneseq
        %v633 = vshrl.u32 %v632, 7
        %v634 = vsub.s32 0, %v633
        %v635 = vrot.slane %v630, %v634
        %vm637 = vcmask 523264
        %v639 = vsel %vm637, %v621, 0
        %641 = vmatprep.subr.mxu0 0.0
        %642 = vmatpush1.msra.mxu0 %v622
        %643 = vmatprep.subr.mxu0 0.0
        %644 = vmatpush1.msra.mxu0 %v623
        %645 = vmatprep.subr.mxu0 0.0
        %646 = vmatpush1.msra.mxu0 %v624
        %647 = vmatprep.subr.mxu0 0.0
        %648 = vmatpush1.msra.mxu0 %v625
        %649 = vmatprep.subr.mxu0 0.0
        %650 = vmatpush1.msra.mxu0 %v626
        %651 = vmatprep.subr.mxu0 0.0
        %652 = vmatpush1.msra.mxu0 %v627
        %653 = vmatprep.subr.mxu0 0.0
        %654 = vmatpush1.msra.mxu0 %v628
        %655 = vmatprep.subr.mxu0 0.0
        %656 = vmatpush1.msra.mxu0 %v629
        %657 = vmatprep.subr.mxu0 0.0
        %658 = vmatpush1.msra.mxu0 0.0
        %659 = vmatprep.subr.mxu0 0.0
        %660 = vmatpush1.msra.mxu0 0.0
        %661 = vmatprep.subr.mxu0 0.0
        %662 = vmatpush1.msra.mxu0 0.0
        %663 = vmatprep.subr.mxu0 0.0
        %664 = vmatpush1.msra.mxu0 0.0
        %665 = vmatprep.subr.mxu0 0.0
        %666 = vmatpush1.msra.mxu0 0.0
        %667 = vmatprep.subr.mxu0 0.0
        %668 = vmatpush1.msra.mxu0 0.0
        %669 = vmatprep.subr.mxu0 0.0
        %670 = vmatpush1.msra.mxu0 0.0
        %671 = vmatprep.subr.mxu0 0.0
        %672 = vmatpush1.msra.mxu0 0.0
        %673 = vmatprep.subr.mxu0 0.0
        %674 = vmatpush1.msra.mxu0 0.0
        %675 = vmatprep.subr.mxu0 0.0
        %676 = vmatpush1.msra.mxu0 0.0
        %677 = vmatprep.subr.mxu0 0.0
        %678 = vmatpush1.msra.mxu0 0.0
        %679 = vmatprep.subr.mxu0 0.0
        %680 = vmatpush1.msra.mxu0 0.0
        %681 = vmatprep.subr.mxu0 0.0
        %682 = vmatpush1.msra.mxu0 0.0
        %683 = vmatprep.subr.mxu0 0.0
        %684 = vmatpush1.msra.mxu0 0.0
        %685 = vmatprep.subr.mxu0 0.0
        %686 = vmatpush1.msra.mxu0 0.0
        %687 = vmatprep.subr.mxu0 0.0
        %688 = vmatpush1.msra.mxu0 0.0
        %689 = vmatprep.subr.mxu0 0.0
        %690 = vmatpush1.msra.mxu0 0.0
        %691 = vmatprep.subr.mxu0 0.0
        %692 = vmatpush1.msra.mxu0 0.0
        %693 = vmatprep.subr.mxu0 0.0
        %694 = vmatpush1.msra.mxu0 0.0
        %695 = vmatprep.subr.mxu0 0.0
        %696 = vmatpush1.msra.mxu0 0.0
        %697 = vmatprep.subr.mxu0 0.0
        %698 = vmatpush1.msra.mxu0 0.0
        %699 = vmatprep.subr.mxu0 0.0
        %700 = vmatpush1.msra.mxu0 0.0
        %701 = vmatprep.subr.mxu0 0.0
        %702 = vmatpush1.msra.mxu0 0.0
        %703 = vmatprep.subr.mxu0 0.0
        %704 = vmatpush1.msra.mxu0 0.0
        %705 = vmatprep.mubr.f32.mxu0 0.0
        %706 = vmatmul.mubr.f32.gmra.mrb[0].mxu0 %v639
        %v707 = vpop.f32.mrb[0].mxu0
        %v708 = vadd.f32 %v635, %v707
        %v709 = vpop.f32.mrb[0].mxu0
        %710 = vdwg.mxu0
        %v711 = vmax.f32 %v708, 0.0
        %v712 = vld [vmem:[#allocation10] sm:$0xff]
        %v713 = vld [vmem:[#allocation10 + $0x8] sm:$0xff]
        %v714 = vld [vmem:[#allocation10 + $0x10] sm:$0xff]
        %v715 = vld [vmem:[#allocation10 + $0x18] sm:$0xff]
        %v716 = vld [vmem:[#allocation10 + $0x20] sm:$0xff]
        %v717 = vld [vmem:[#allocation10 + $0x28] sm:$0xff]
        %v718 = vld [vmem:[#allocation10 + $0x30] sm:$0xff]
        %v719 = vld [vmem:[#allocation10 + $0x38] sm:$0xff]
        %v720 = vld [vmem:[#allocation10 + $0x40] sm:$0xff]
        %v721 = vld [vmem:[#allocation10 + $0x48] sm:$0xff]
        %v722 = vld [vmem:[#allocation10 + $0x50] sm:$0xff]
        %v723 = vld [vmem:[#allocation10 + $0x58] sm:$0xff]
        %v724 = vld [vmem:[#allocation10 + $0x60] sm:$0xff]
        %v725 = vld [vmem:[#allocation10 + $0x68] sm:$0xff]
        %v726 = vld [vmem:[#allocation10 + $0x70] sm:$0xff]
        %v727 = vld [vmem:[#allocation10 + $0x78] sm:$0xff]
        %v728 = vld [vmem:[#allocation10 + $0x80] sm:$0xff]
        %v729 = vld [vmem:[#allocation10 + $0x88] sm:$0xff]
        %v730 = vld [vmem:[#allocation10 + $0x90] sm:$0xff]
        %v731 = vld [vmem:[#allocation10 + $0x98] sm:$0xff]
        %v732 = vld [vmem:[#allocation10 + $0xa0] sm:$0xff]
        %v733 = vld [vmem:[#allocation10 + $0xa8] sm:$0xff]
        %v734 = vld [vmem:[#allocation10 + $0xb0] sm:$0xff]
        %v735 = vld [vmem:[#allocation10 + $0xb8] sm:$0xff]
        %v736 = vld [vmem:[#allocation10 + $0xc0] sm:$0xff]
        %v737 = vld [vmem:[#allocation10 + $0xc8] sm:$0xff]
        %v738 = vld [vmem:[#allocation10 + $0xd0] sm:$0xff]
        %v739 = vld [vmem:[#allocation10 + $0xd8] sm:$0xff]
        %v740 = vld [vmem:[#allocation10 + $0xe0] sm:$0xff]
        %v741 = vld [vmem:[#allocation10 + $0xe8] sm:$0xff]
        %v742 = vld [vmem:[#allocation10 + $0xf0] sm:$0xff]
        %v743 = vld [vmem:[#allocation10 + $0xf8] sm:$0xff]
        %v744 = vld [vmem:[%s7] sm:$0x3]
        %v746 = vlaneseq
        %v747 = vshrl.u32 %v746, 7
        %v748 = vsub.s32 0, %v747
        %v749 = vrot.slane %v744, %v748
        %v750 = vlaneseq
        %v751 = vshrl.u32 %v750, 7
        %v752 = vsub.s32 1, %v751
        %v753 = vrot.slane %v744, %v752
        %756 = vmatprep.subr.mxu0 %v713
        %757 = vmatpush1.msra.mxu0 %v712
        %758 = vmatprep.subr.mxu0 %v715
        %759 = vmatpush1.msra.mxu0 %v714
        %760 = vmatprep.subr.mxu0 %v717
        %761 = vmatpush1.msra.mxu0 %v716
        %762 = vmatprep.subr.mxu0 %v719
        %763 = vmatpush1.msra.mxu0 %v718
        %764 = vmatprep.subr.mxu0 %v721
        %765 = vmatpush1.msra.mxu0 %v720
        %766 = vmatprep.subr.mxu0 %v723
        %767 = vmatpush1.msra.mxu0 %v722
        %768 = vmatprep.subr.mxu0 %v725
        %769 = vmatpush1.msra.mxu0 %v724
        %770 = vmatprep.subr.mxu0 %v727
        %771 = vmatpush1.msra.mxu0 %v726
        %772 = vmatprep.subr.mxu0 %v729
        %773 = vmatpush1.msra.mxu0 %v728
        %774 = vmatprep.subr.mxu0 %v731
        %775 = vmatpush1.msra.mxu0 %v730
        %776 = vmatprep.subr.mxu0 %v733
        %777 = vmatpush1.msra.mxu0 %v732
        %778 = vmatprep.subr.mxu0 %v735
        %779 = vmatpush1.msra.mxu0 %v734
        %780 = vmatprep.subr.mxu0 %v737
        %781 = vmatpush1.msra.mxu0 %v736
        %782 = vmatprep.subr.mxu0 %v739
        %783 = vmatpush1.msra.mxu0 %v738
        %784 = vmatprep.subr.mxu0 %v741
        %785 = vmatpush1.msra.mxu0 %v740
        %786 = vmatprep.subr.mxu0 %v743
        %787 = vmatpush1.msra.mxu0 %v742
        %788 = vmatprep.subr.mxu0 0.0
        %789 = vmatpush1.msra.mxu0 0.0
        %790 = vmatprep.subr.mxu0 0.0
        %791 = vmatpush1.msra.mxu0 0.0
        %792 = vmatprep.subr.mxu0 0.0
        %793 = vmatpush1.msra.mxu0 0.0
        %794 = vmatprep.subr.mxu0 0.0
        %795 = vmatpush1.msra.mxu0 0.0
        %796 = vmatprep.subr.mxu0 0.0
        %797 = vmatpush1.msra.mxu0 0.0
        %798 = vmatprep.subr.mxu0 0.0
        %799 = vmatpush1.msra.mxu0 0.0
        %800 = vmatprep.subr.mxu0 0.0
        %801 = vmatpush1.msra.mxu0 0.0
        %802 = vmatprep.subr.mxu0 0.0
        %803 = vmatpush1.msra.mxu0 0.0
        %804 = vmatprep.subr.mxu0 0.0
        %805 = vmatpush1.msra.mxu0 0.0
        %806 = vmatprep.subr.mxu0 0.0
        %807 = vmatpush1.msra.mxu0 0.0
        %808 = vmatprep.subr.mxu0 0.0
        %809 = vmatpush1.msra.mxu0 0.0
        %810 = vmatprep.subr.mxu0 0.0
        %811 = vmatpush1.msra.mxu0 0.0
        %812 = vmatprep.subr.mxu0 0.0
        %813 = vmatpush1.msra.mxu0 0.0
        %814 = vmatprep.subr.mxu0 0.0
        %815 = vmatpush1.msra.mxu0 0.0
        %816 = vmatprep.subr.mxu0 0.0
        %817 = vmatpush1.msra.mxu0 0.0
        %818 = vmatprep.subr.mxu0 0.0
        %819 = vmatpush1.msra.mxu0 0.0
        %820 = vmatprep.mubr.f32.mxu0 0.0
        %821 = vmatmul.mubr.f32.gmra.mrb[0].mxu0 %v711
        %v822 = vpop.f32.mrb[0].mxu0
        %v823 = vadd.f32 %v749, %v822
        %v824 = vpop.f32.mrb[0].mxu0
        %v825 = vadd.f32 %v753, %v824
        %826 = vdwg.mxu0
        %v827 = vld [vmem:[#allocation13] sm:$0x3]
        %v829 = vlaneseq
        %v830 = vshrl.u32 %v829, 7
        %v831 = vsub.s32 0, %v830
        %v832 = vrot.slane %v827, %v831
        %v833 = vlaneseq
        %v834 = vshrl.u32 %v833, 7
        %v835 = vsub.s32 1, %v834
        %v836 = vrot.slane %v827, %v835
        %v839 = vadd.f32 %v823, %v832
        %v840 = vadd.f32 %v825, %v836
        %v841 = vld [vmem:[#allocation11] sm:$0xff]
        %v842 = vld [vmem:[#allocation11 + $0x8] sm:$0xff]
        %v843 = vld [vmem:[#allocation11 + $0x10] sm:$0xff]
        %v844 = vld [vmem:[#allocation11 + $0x18] sm:$0xff]
        %v845 = vld [vmem:[#allocation11 + $0x20] sm:$0xff]
        %v846 = vld [vmem:[#allocation11 + $0x28] sm:$0xff]
        %v847 = vld [vmem:[#allocation11 + $0x30] sm:$0xff]
        %v848 = vld [vmem:[#allocation11 + $0x38] sm:$0xff]
        %v849 = vld [vmem:[#allocation11 + $0x40] sm:$0xff]
        %v850 = vld [vmem:[#allocation11 + $0x48] sm:$0xff]
        %v851 = vld [vmem:[#allocation11 + $0x50] sm:$0xff]
        %v852 = vld [vmem:[#allocation11 + $0x58] sm:$0xff]
        %v853 = vld [vmem:[#allocation11 + $0x60] sm:$0xff]
        %v854 = vld [vmem:[#allocation11 + $0x68] sm:$0xff]
        %v855 = vld [vmem:[#allocation11 + $0x70] sm:$0xff]
        %v856 = vld [vmem:[#allocation11 + $0x78] sm:$0xff]
        %v858 = vsel %vm637, 0.0, 0
        %860 = vmatprep.subr.mxu0 %v842
        %861 = vmatpush1.msra.mxu0 %v841
        %862 = vmatprep.subr.mxu0 %v844
        %863 = vmatpush1.msra.mxu0 %v843
        %864 = vmatprep.subr.mxu0 %v846
        %865 = vmatpush1.msra.mxu0 %v845
        %866 = vmatprep.subr.mxu0 %v848
        %867 = vmatpush1.msra.mxu0 %v847
        %868 = vmatprep.subr.mxu0 %v850
        %869 = vmatpush1.msra.mxu0 %v849
        %870 = vmatprep.subr.mxu0 %v852
        %871 = vmatpush1.msra.mxu0 %v851
        %872 = vmatprep.subr.mxu0 %v854
        %873 = vmatpush1.msra.mxu0 %v853
        %874 = vmatprep.subr.mxu0 %v856
        %875 = vmatpush1.msra.mxu0 %v855
        %876 = vmatprep.subr.mxu0 0.0
        %877 = vmatpush1.msra.mxu0 0.0
        %878 = vmatprep.subr.mxu0 0.0
        %879 = vmatpush1.msra.mxu0 0.0
        %880 = vmatprep.subr.mxu0 0.0
        %881 = vmatpush1.msra.mxu0 0.0
        %882 = vmatprep.subr.mxu0 0.0
        %883 = vmatpush1.msra.mxu0 0.0
        %884 = vmatprep.subr.mxu0 0.0
        %885 = vmatpush1.msra.mxu0 0.0
        %886 = vmatprep.subr.mxu0 0.0
        %887 = vmatpush1.msra.mxu0 0.0
        %888 = vmatprep.subr.mxu0 0.0
        %889 = vmatpush1.msra.mxu0 0.0
        %890 = vmatprep.subr.mxu0 0.0
        %891 = vmatpush1.msra.mxu0 0.0
        %892 = vmatprep.subr.mxu0 0.0
        %893 = vmatpush1.msra.mxu0 0.0
        %894 = vmatprep.subr.mxu0 0.0
        %895 = vmatpush1.msra.mxu0 0.0
        %896 = vmatprep.subr.mxu0 0.0
        %897 = vmatpush1.msra.mxu0 0.0
        %898 = vmatprep.subr.mxu0 0.0
        %899 = vmatpush1.msra.mxu0 0.0
        %900 = vmatprep.subr.mxu0 0.0
        %901 = vmatpush1.msra.mxu0 0.0
        %902 = vmatprep.subr.mxu0 0.0
        %903 = vmatpush1.msra.mxu0 0.0
        %904 = vmatprep.subr.mxu0 0.0
        %905 = vmatpush1.msra.mxu0 0.0
        %906 = vmatprep.subr.mxu0 0.0
        %907 = vmatpush1.msra.mxu0 0.0
        %908 = vmatprep.subr.mxu0 0.0
        %909 = vmatpush1.msra.mxu0 0.0
        %910 = vmatprep.subr.mxu0 0.0
        %911 = vmatpush1.msra.mxu0 0.0
        %912 = vmatprep.subr.mxu0 0.0
        %913 = vmatpush1.msra.mxu0 0.0
        %914 = vmatprep.subr.mxu0 0.0
        %915 = vmatpush1.msra.mxu0 0.0
        %916 = vmatprep.subr.mxu0 0.0
        %917 = vmatpush1.msra.mxu0 0.0
        %918 = vmatprep.subr.mxu0 0.0
        %919 = vmatpush1.msra.mxu0 0.0
        %920 = vmatprep.subr.mxu0 0.0
        %921 = vmatpush1.msra.mxu0 0.0
        %922 = vmatprep.subr.mxu0 0.0
        %923 = vmatpush1.msra.mxu0 0.0
        %924 = vmatprep.mubr.f32.mxu0 0.0
        %925 = vmatmul.mubr.f32.gmra.mrb[0].mxu0 %v858
        %v926 = vpop.f32.mrb[0].mxu0
        %v927 = vadd.f32 0.0, %v926
        %v928 = vpop.f32.mrb[0].mxu0
        %v929 = vadd.f32 0.0, %v928
        %930 = vdwg.mxu0
        %v931 = vadd.f32 %v839, %v927
        %v932 = vadd.f32 %v840, %v929
        %v933 = vxor.u32 %v931, 2147483648
        %v934 = vmul.f32 %v933, 1.442695
        %v935 = vpow.pop %v934
        %v936 = vadd.f32 %v935, 1.0
        %v937 = vrcp.pop %v936
        %v938 = vmul.f32 1.0, %v937
        %v939 = vtanh.pop %v932
        %v940 = vxor.u32 %v932, 2147483648
        %v941 = vmul.f32 %v940, 1.442695
        %v942 = vpow.pop %v941
        %v943 = vadd.f32 %v942, 1.0
        %v944 = vrcp.pop %v943
        %v945 = vmul.f32 1.0, %v944
        %v946 = vmul.f32 %v938, 0.0
        %v947 = vmul.f32 %v938, %v939
        %949 = vrot.lane.b32.xlu0 %v947, 64
        %v950 = vpop.permute.xlu0 %949
        %v952 = vadd.f32 %v946, %v950
        %v953 = vtanh.pop %v952
        %v954 = vmul.f32 %v945, %v953
        %956 = vrot.lane.b32.xlu0 %v954, 64
        %v957 = vpop.permute.xlu0 %956
        %v958 = vsel %vm637, %v957, 0
        %960 = vmatprep.subr.mxu0 %v842
        %961 = vmatpush1.msra.mxu0 %v841
        %962 = vmatprep.subr.mxu0 %v844
        %963 = vmatpush1.msra.mxu0 %v843
        %964 = vmatprep.subr.mxu0 %v846
        %965 = vmatpush1.msra.mxu0 %v845
        %966 = vmatprep.subr.mxu0 %v848
        %967 = vmatpush1.msra.mxu0 %v847
        %968 = vmatprep.subr.mxu0 %v850
        %969 = vmatpush1.msra.mxu0 %v849
        %970 = vmatprep.subr.mxu0 %v852
        %971 = vmatpush1.msra.mxu0 %v851
        %972 = vmatprep.subr.mxu0 %v854
        %973 = vmatpush1.msra.mxu0 %v853
        %974 = vmatprep.subr.mxu0 %v856
        %975 = vmatpush1.msra.mxu0 %v855
        %976 = vmatprep.subr.mxu0 0.0
        %977 = vmatpush1.msra.mxu0 0.0
        %978 = vmatprep.subr.mxu0 0.0
        %979 = vmatpush1.msra.mxu0 0.0
        %980 = vmatprep.subr.mxu0 0.0
        %981 = vmatpush1.msra.mxu0 0.0
        %982 = vmatprep.subr.mxu0 0.0
        %983 = vmatpush1.msra.mxu0 0.0
        %984 = vmatprep.subr.mxu0 0.0
        %985 = vmatpush1.msra.mxu0 0.0
        %986 = vmatprep.subr.mxu0 0.0
        %987 = vmatpush1.msra.mxu0 0.0
        %988 = vmatprep.subr.mxu0 0.0
        %989 = vmatpush1.msra.mxu0 0.0
        %990 = vmatprep.subr.mxu0 0.0
        %991 = vmatpush1.msra.mxu0 0.0
        %992 = vmatprep.subr.mxu0 0.0
        %993 = vmatpush1.msra.mxu0 0.0
        %994 = vmatprep.subr.mxu0 0.0
        %995 = vmatpush1.msra.mxu0 0.0
        %996 = vmatprep.subr.mxu0 0.0
        %997 = vmatpush1.msra.mxu0 0.0
        %998 = vmatprep.subr.mxu0 0.0
        %999 = vmatpush1.msra.mxu0 0.0
        %1000 = vmatprep.subr.mxu0 0.0
        %1001 = vmatpush1.msra.mxu0 0.0
        %1002 = vmatprep.subr.mxu0 0.0
        %1003 = vmatpush1.msra.mxu0 0.0
        %1004 = vmatprep.subr.mxu0 0.0
        %1005 = vmatpush1.msra.mxu0 0.0
        %1006 = vmatprep.subr.mxu0 0.0
        %1007 = vmatpush1.msra.mxu0 0.0
        %1008 = vmatprep.subr.mxu0 0.0
        %1009 = vmatpush1.msra.mxu0 0.0
        %1010 = vmatprep.subr.mxu0 0.0
        %1011 = vmatpush1.msra.mxu0 0.0
        %1012 = vmatprep.subr.mxu0 0.0
        %1013 = vmatpush1.msra.mxu0 0.0
        %1014 = vmatprep.subr.mxu0 0.0
        %1015 = vmatpush1.msra.mxu0 0.0
        %1016 = vmatprep.subr.mxu0 0.0
        %1017 = vmatpush1.msra.mxu0 0.0
        %1018 = vmatprep.subr.mxu0 0.0
        %1019 = vmatpush1.msra.mxu0 0.0
        %1020 = vmatprep.subr.mxu0 0.0
        %1021 = vmatpush1.msra.mxu0 0.0
        %1022 = vmatprep.subr.mxu0 0.0
        %1023 = vmatpush1.msra.mxu0 0.0
        %1024 = vmatprep.mubr.f32.mxu0 0.0
        %1025 = vmatmul.mubr.f32.gmra.mrb[0].mxu0 %v958
        %v1026 = vpop.f32.mrb[0].mxu0
        %v1027 = vadd.f32 0.0, %v1026
        %v1028 = vpop.f32.mrb[0].mxu0
        %v1029 = vadd.f32 0.0, %v1028
        %1030 = vdwg.mxu0
        %v1033 = vrot.slane %v1027, 7
        %v1034 = vrot.slane %v1029, 7
        %v1037 = vadd.f32 %v839, %v1033
        %v1038 = vadd.f32 %v840, %v1034
        %v1039 = vxor.u32 %v1037, 2147483648
        %v1040 = vmul.f32 %v1039, 1.442695
        %v1041 = vpow.pop %v1040
        %v1042 = vadd.f32 %v1041, 1.0
        %v1043 = vrcp.pop %v1042
        %v1044 = vmul.f32 1.0, %v1043
        %v1045 = vtanh.pop %v1038
        %v1046 = vxor.u32 %v1038, 2147483648
        %v1047 = vmul.f32 %v1046, 1.442695
        %v1048 = vpow.pop %v1047
        %v1049 = vadd.f32 %v1048, 1.0
        %v1050 = vrcp.pop %v1049
        %v1051 = vmul.f32 1.0, %v1050
        %v1053 = vrot.slane %v952, 7
        %v1055 = vmul.f32 %v1044, %v1053
        %v1056 = vmul.f32 %v1044, %v1045
        %1058 = vrot.lane.b32.xlu0 %v1056, 64
        %v1059 = vpop.permute.xlu0 %1058
        %v1061 = vadd.f32 %v1055, %v1059
        %v1062 = vtanh.pop %v1061
        %v1063 = vmul.f32 %v1051, %v1062
        %v1065 = vrot.slane %v1063, 1
        %1066 = vrot.lane.b32.xlu0 %v1065, 64
        %v1067 = vpop.permute.xlu0 %1066
        %v1068 = vsel %vm637, %v1067, 0
        %1070 = vmatprep.subr.mxu0 %v842
        %1071 = vmatpush1.msra.mxu0 %v841
        %1072 = vmatprep.subr.mxu0 %v844
        %1073 = vmatpush1.msra.mxu0 %v843
        %1074 = vmatprep.subr.mxu0 %v846
        %1075 = vmatpush1.msra.mxu0 %v845
        %1076 = vmatprep.subr.mxu0 %v848
        %1077 = vmatpush1.msra.mxu0 %v847
        %1078 = vmatprep.subr.mxu0 %v850
        %1079 = vmatpush1.msra.mxu0 %v849
        %1080 = vmatprep.subr.mxu0 %v852
        %1081 = vmatpush1.msra.mxu0 %v851
        %1082 = vmatprep.subr.mxu0 %v854
        %1083 = vmatpush1.msra.mxu0 %v853
        %1084 = vmatprep.subr.mxu0 %v856
        %1085 = vmatpush1.msra.mxu0 %v855
        %1086 = vmatprep.subr.mxu0 0.0
        %1087 = vmatpush1.msra.mxu0 0.0
        %1088 = vmatprep.subr.mxu0 0.0
        %1089 = vmatpush1.msra.mxu0 0.0
        %1090 = vmatprep.subr.mxu0 0.0
        %1091 = vmatpush1.msra.mxu0 0.0
        %1092 = vmatprep.subr.mxu0 0.0
        %1093 = vmatpush1.msra.mxu0 0.0
        %1094 = vmatprep.subr.mxu0 0.0
        %1095 = vmatpush1.msra.mxu0 0.0
        %1096 = vmatprep.subr.mxu0 0.0
        %1097 = vmatpush1.msra.mxu0 0.0
        %1098 = vmatprep.subr.mxu0 0.0
        %1099 = vmatpush1.msra.mxu0 0.0
        %1100 = vmatprep.subr.mxu0 0.0
        %1101 = vmatpush1.msra.mxu0 0.0
        %1102 = vmatprep.subr.mxu0 0.0
        %1103 = vmatpush1.msra.mxu0 0.0
        %1104 = vmatprep.subr.mxu0 0.0
        %1105 = vmatpush1.msra.mxu0 0.0
        %1106 = vmatprep.subr.mxu0 0.0
        %1107 = vmatpush1.msra.mxu0 0.0
        %1108 = vmatprep.subr.mxu0 0.0
        %1109 = vmatpush1.msra.mxu0 0.0
        %1110 = vmatprep.subr.mxu0 0.0
        %1111 = vmatpush1.msra.mxu0 0.0
        %1112 = vmatprep.subr.mxu0 0.0
        %1113 = vmatpush1.msra.mxu0 0.0
        %1114 = vmatprep.subr.mxu0 0.0
        %1115 = vmatpush1.msra.mxu0 0.0
        %1116 = vmatprep.subr.mxu0 0.0
        %1117 = vmatpush1.msra.mxu0 0.0
        %1118 = vmatprep.subr.mxu0 0.0
        %1119 = vmatpush1.msra.mxu0 0.0
        %1120 = vmatprep.subr.mxu0 0.0
        %1121 = vmatpush1.msra.mxu0 0.0
        %1122 = vmatprep.subr.mxu0 0.0
        %1123 = vmatpush1.msra.mxu0 0.0
        %1124 = vmatprep.subr.mxu0 0.0
        %1125 = vmatpush1.msra.mxu0 0.0
        %1126 = vmatprep.subr.mxu0 0.0
        %1127 = vmatpush1.msra.mxu0 0.0
        %1128 = vmatprep.subr.mxu0 0.0
        %1129 = vmatpush1.msra.mxu0 0.0
        %1130 = vmatprep.subr.mxu0 0.0
        %1131 = vmatpush1.msra.mxu0 0.0
        %1132 = vmatprep.subr.mxu0 0.0
        %1133 = vmatpush1.msra.mxu0 0.0
        %1134 = vmatprep.mubr.f32.mxu0 0.0
        %1135 = vmatmul.mubr.f32.gmra.mrb[0].mxu0 %v1068
        %v1136 = vpop.f32.mrb[0].mxu0
        %v1137 = vadd.f32 0.0, %v1136
        %v1138 = vpop.f32.mrb[0].mxu0
        %v1139 = vadd.f32 0.0, %v1138
        %1140 = vdwg.mxu0
        %v1143 = vrot.slane %v1137, 6
        %v1144 = vrot.slane %v1139, 6
        %v1147 = vadd.f32 %v839, %v1143
        %v1148 = vadd.f32 %v840, %v1144
        %v1149 = vxor.u32 %v1147, 2147483648
        %v1150 = vmul.f32 %v1149, 1.442695
        %v1151 = vpow.pop %v1150
        %v1152 = vadd.f32 %v1151, 1.0
        %v1153 = vrcp.pop %v1152
        %v1154 = vmul.f32 1.0, %v1153
        %v1155 = vtanh.pop %v1148
        %v1156 = vxor.u32 %v1148, 2147483648
        %v1157 = vmul.f32 %v1156, 1.442695
        %v1158 = vpow.pop %v1157
        %v1159 = vadd.f32 %v1158, 1.0
        %v1160 = vrcp.pop %v1159
        %v1161 = vmul.f32 1.0, %v1160
        %v1163 = vrot.slane %v1061, 7
        %v1165 = vmul.f32 %v1154, %v1163
        %v1166 = vmul.f32 %v1154, %v1155
        %1168 = vrot.lane.b32.xlu0 %v1166, 64
        %v1169 = vpop.permute.xlu0 %1168
        %v1171 = vadd.f32 %v1165, %v1169
        %v1172 = vtanh.pop %v1171
        %v1173 = vmul.f32 %v1161, %v1172
        %v1175 = vrot.slane %v1173, 2
        %1176 = vrot.lane.b32.xlu0 %v1175, 64
        %v1177 = vpop.permute.xlu0 %1176
        %v1178 = vsel %vm637, %v1177, 0
        %1180 = vmatprep.subr.mxu0 %v842
        %1181 = vmatpush1.msra.mxu0 %v841
        %1182 = vmatprep.subr.mxu0 %v844
        %1183 = vmatpush1.msra.mxu0 %v843
        %1184 = vmatprep.subr.mxu0 %v846
        %1185 = vmatpush1.msra.mxu0 %v845
        %1186 = vmatprep.subr.mxu0 %v848
        %1187 = vmatpush1.msra.mxu0 %v847
        %1188 = vmatprep.subr.mxu0 %v850
        %1189 = vmatpush1.msra.mxu0 %v849
        %1190 = vmatprep.subr.mxu0 %v852
        %1191 = vmatpush1.msra.mxu0 %v851
        %1192 = vmatprep.subr.mxu0 %v854
        %1193 = vmatpush1.msra.mxu0 %v853
        %1194 = vmatprep.subr.mxu0 %v856
        %1195 = vmatpush1.msra.mxu0 %v855
        %1196 = vmatprep.subr.mxu0 0.0
        %1197 = vmatpush1.msra.mxu0 0.0
        %1198 = vmatprep.subr.mxu0 0.0
        %1199 = vmatpush1.msra.mxu0 0.0
        %1200 = vmatprep.subr.mxu0 0.0
        %1201 = vmatpush1.msra.mxu0 0.0
        %1202 = vmatprep.subr.mxu0 0.0
        %1203 = vmatpush1.msra.mxu0 0.0
        %1204 = vmatprep.subr.mxu0 0.0
        %1205 = vmatpush1.msra.mxu0 0.0
        %1206 = vmatprep.subr.mxu0 0.0
        %1207 = vmatpush1.msra.mxu0 0.0
        %1208 = vmatprep.subr.mxu0 0.0
        %1209 = vmatpush1.msra.mxu0 0.0
        %1210 = vmatprep.subr.mxu0 0.0
        %1211 = vmatpush1.msra.mxu0 0.0
        %1212 = vmatprep.subr.mxu0 0.0
        %1213 = vmatpush1.msra.mxu0 0.0
        %1214 = vmatprep.subr.mxu0 0.0
        %1215 = vmatpush1.msra.mxu0 0.0
        %1216 = vmatprep.subr.mxu0 0.0
        %1217 = vmatpush1.msra.mxu0 0.0
        %1218 = vmatprep.subr.mxu0 0.0
        %1219 = vmatpush1.msra.mxu0 0.0
        %1220 = vmatprep.subr.mxu0 0.0
        %1221 = vmatpush1.msra.mxu0 0.0
        %1222 = vmatprep.subr.mxu0 0.0
        %1223 = vmatpush1.msra.mxu0 0.0
        %1224 = vmatprep.subr.mxu0 0.0
        %1225 = vmatpush1.msra.mxu0 0.0
        %1226 = vmatprep.subr.mxu0 0.0
        %1227 = vmatpush1.msra.mxu0 0.0
        %1228 = vmatprep.subr.mxu0 0.0
        %1229 = vmatpush1.msra.mxu0 0.0
        %1230 = vmatprep.subr.mxu0 0.0
        %1231 = vmatpush1.msra.mxu0 0.0
        %1232 = vmatprep.subr.mxu0 0.0
        %1233 = vmatpush1.msra.mxu0 0.0
        %1234 = vmatprep.subr.mxu0 0.0
        %1235 = vmatpush1.msra.mxu0 0.0
        %1236 = vmatprep.subr.mxu0 0.0
        %1237 = vmatpush1.msra.mxu0 0.0
        %1238 = vmatprep.subr.mxu0 0.0
        %1239 = vmatpush1.msra.mxu0 0.0
        %1240 = vmatprep.subr.mxu0 0.0
        %1241 = vmatpush1.msra.mxu0 0.0
        %1242 = vmatprep.subr.mxu0 0.0
        %1243 = vmatpush1.msra.mxu0 0.0
        %1244 = vmatprep.mubr.f32.mxu0 0.0
        %1245 = vmatmul.mubr.f32.gmra.mrb[0].mxu0 %v1178
        %v1246 = vpop.f32.mrb[0].mxu0
        %v1247 = vadd.f32 0.0, %v1246
        %v1248 = vpop.f32.mrb[0].mxu0
        %v1249 = vadd.f32 0.0, %v1248
        %1250 = vdwg.mxu0
        %v1253 = vrot.slane %v1247, 5
        %v1254 = vrot.slane %v1249, 5
        %v1257 = vadd.f32 %v839, %v1253
        %v1258 = vadd.f32 %v840, %v1254
        %v1259 = vxor.u32 %v1257, 2147483648
        %v1260 = vmul.f32 %v1259, 1.442695
        %v1261 = vpow.pop %v1260
        %v1262 = vadd.f32 %v1261, 1.0
        %v1263 = vrcp.pop %v1262
        %v1264 = vmul.f32 1.0, %v1263
        %v1265 = vtanh.pop %v1258
        %v1266 = vxor.u32 %v1258, 2147483648
        %v1267 = vmul.f32 %v1266, 1.442695
        %v1268 = vpow.pop %v1267
        %v1269 = vadd.f32 %v1268, 1.0
        %v1270 = vrcp.pop %v1269
        %v1271 = vmul.f32 1.0, %v1270
        %v1273 = vrot.slane %v1171, 7
        %v1275 = vmul.f32 %v1264, %v1273
        %v1276 = vmul.f32 %v1264, %v1265
        %1278 = vrot.lane.b32.xlu0 %v1276, 64
        %v1279 = vpop.permute.xlu0 %1278
        %v1281 = vadd.f32 %v1275, %v1279
        %v1282 = vtanh.pop %v1281
        %v1283 = vmul.f32 %v1271, %v1282
        %v1285 = vrot.slane %v1283, 3
        %1286 = vrot.lane.b32.xlu0 %v1285, 64
        %v1287 = vpop.permute.xlu0 %1286
        %v1288 = vsel %vm637, %v1287, 0
        %1290 = vmatprep.subr.mxu0 %v842
        %1291 = vmatpush1.msra.mxu0 %v841
        %1292 = vmatprep.subr.mxu0 %v844
        %1293 = vmatpush1.msra.mxu0 %v843
        %1294 = vmatprep.subr.mxu0 %v846
        %1295 = vmatpush1.msra.mxu0 %v845
        %1296 = vmatprep.subr.mxu0 %v848
        %1297 = vmatpush1.msra.mxu0 %v847
        %1298 = vmatprep.subr.mxu0 %v850
        %1299 = vmatpush1.msra.mxu0 %v849
        %1300 = vmatprep.subr.mxu0 %v852
        %1301 = vmatpush1.msra.mxu0 %v851
        %1302 = vmatprep.subr.mxu0 %v854
        %1303 = vmatpush1.msra.mxu0 %v853
        %1304 = vmatprep.subr.mxu0 %v856
        %1305 = vmatpush1.msra.mxu0 %v855
        %1306 = vmatprep.subr.mxu0 0.0
        %1307 = vmatpush1.msra.mxu0 0.0
        %1308 = vmatprep.subr.mxu0 0.0
        %1309 = vmatpush1.msra.mxu0 0.0
        %1310 = vmatprep.subr.mxu0 0.0
        %1311 = vmatpush1.msra.mxu0 0.0
        %1312 = vmatprep.subr.mxu0 0.0
        %1313 = vmatpush1.msra.mxu0 0.0
        %1314 = vmatprep.subr.mxu0 0.0
        %1315 = vmatpush1.msra.mxu0 0.0
        %1316 = vmatprep.subr.mxu0 0.0
        %1317 = vmatpush1.msra.mxu0 0.0
        %1318 = vmatprep.subr.mxu0 0.0
        %1319 = vmatpush1.msra.mxu0 0.0
        %1320 = vmatprep.subr.mxu0 0.0
        %1321 = vmatpush1.msra.mxu0 0.0
        %1322 = vmatprep.subr.mxu0 0.0
        %1323 = vmatpush1.msra.mxu0 0.0
        %1324 = vmatprep.subr.mxu0 0.0
        %1325 = vmatpush1.msra.mxu0 0.0
        %1326 = vmatprep.subr.mxu0 0.0
        %1327 = vmatpush1.msra.mxu0 0.0
        %1328 = vmatprep.subr.mxu0 0.0
        %1329 = vmatpush1.msra.mxu0 0.0
        %1330 = vmatprep.subr.mxu0 0.0
        %1331 = vmatpush1.msra.mxu0 0.0
        %1332 = vmatprep.subr.mxu0 0.0
        %1333 = vmatpush1.msra.mxu0 0.0
        %1334 = vmatprep.subr.mxu0 0.0
        %1335 = vmatpush1.msra.mxu0 0.0
        %1336 = vmatprep.subr.mxu0 0.0
        %1337 = vmatpush1.msra.mxu0 0.0
        %1338 = vmatprep.subr.mxu0 0.0
        %1339 = vmatpush1.msra.mxu0 0.0
        %1340 = vmatprep.subr.mxu0 0.0
        %1341 = vmatpush1.msra.mxu0 0.0
        %1342 = vmatprep.subr.mxu0 0.0
        %1343 = vmatpush1.msra.mxu0 0.0
        %1344 = vmatprep.subr.mxu0 0.0
        %1345 = vmatpush1.msra.mxu0 0.0
        %1346 = vmatprep.subr.mxu0 0.0
        %1347 = vmatpush1.msra.mxu0 0.0
        %1348 = vmatprep.subr.mxu0 0.0
        %1349 = vmatpush1.msra.mxu0 0.0
        %1350 = vmatprep.subr.mxu0 0.0
        %1351 = vmatpush1.msra.mxu0 0.0
        %1352 = vmatprep.subr.mxu0 0.0
        %1353 = vmatpush1.msra.mxu0 0.0
        %1354 = vmatprep.mubr.f32.mxu0 0.0
        %1355 = vmatmul.mubr.f32.gmra.mrb[0].mxu0 %v1288
        %v1356 = vpop.f32.mrb[0].mxu0
        %v1357 = vadd.f32 0.0, %v1356
        %v1358 = vpop.f32.mrb[0].mxu0
        %v1359 = vadd.f32 0.0, %v1358
        %1360 = vdwg.mxu0
        %v1363 = vrot.slane %v1357, 4
        %v1364 = vrot.slane %v1359, 4
        %v1367 = vadd.f32 %v839, %v1363
        %v1368 = vadd.f32 %v840, %v1364
        %v1369 = vxor.u32 %v1367, 2147483648
        %v1370 = vmul.f32 %v1369, 1.442695
        %v1371 = vpow.pop %v1370
        %v1372 = vadd.f32 %v1371, 1.0
        %v1373 = vrcp.pop %v1372
        %v1374 = vmul.f32 1.0, %v1373
        %v1375 = vtanh.pop %v1368
        %v1376 = vxor.u32 %v1368, 2147483648
        %v1377 = vmul.f32 %v1376, 1.442695
        %v1378 = vpow.pop %v1377
        %v1379 = vadd.f32 %v1378, 1.0
        %v1380 = vrcp.pop %v1379
        %v1381 = vmul.f32 1.0, %v1380
        %v1383 = vrot.slane %v1281, 7
        %v1385 = vmul.f32 %v1374, %v1383
        %v1386 = vmul.f32 %v1374, %v1375
        %1388 = vrot.lane.b32.xlu0 %v1386, 64
        %v1389 = vpop.permute.xlu0 %1388
        %v1391 = vadd.f32 %v1385, %v1389
        %v1392 = vtanh.pop %v1391
        %v1393 = vmul.f32 %v1381, %v1392
        %v1395 = vrot.slane %v1393, 4
        %1396 = vrot.lane.b32.xlu0 %v1395, 64
        %v1397 = vpop.permute.xlu0 %1396
        %v1398 = vsel %vm637, %v1397, 0
        %1400 = vmatprep.subr.mxu0 %v842
        %1401 = vmatpush1.msra.mxu0 %v841
        %1402 = vmatprep.subr.mxu0 %v844
        %1403 = vmatpush1.msra.mxu0 %v843
        %1404 = vmatprep.subr.mxu0 %v846
        %1405 = vmatpush1.msra.mxu0 %v845
        %1406 = vmatprep.subr.mxu0 %v848
        %1407 = vmatpush1.msra.mxu0 %v847
        %1408 = vmatprep.subr.mxu0 %v850
        %1409 = vmatpush1.msra.mxu0 %v849
        %1410 = vmatprep.subr.mxu0 %v852
        %1411 = vmatpush1.msra.mxu0 %v851
        %1412 = vmatprep.subr.mxu0 %v854
        %1413 = vmatpush1.msra.mxu0 %v853
        %1414 = vmatprep.subr.mxu0 %v856
        %1415 = vmatpush1.msra.mxu0 %v855
        %1416 = vmatprep.subr.mxu0 0.0
        %1417 = vmatpush1.msra.mxu0 0.0
        %1418 = vmatprep.subr.mxu0 0.0
        %1419 = vmatpush1.msra.mxu0 0.0
        %1420 = vmatprep.subr.mxu0 0.0
        %1421 = vmatpush1.msra.mxu0 0.0
        %1422 = vmatprep.subr.mxu0 0.0
        %1423 = vmatpush1.msra.mxu0 0.0
        %1424 = vmatprep.subr.mxu0 0.0
        %1425 = vmatpush1.msra.mxu0 0.0
        %1426 = vmatprep.subr.mxu0 0.0
        %1427 = vmatpush1.msra.mxu0 0.0
        %1428 = vmatprep.subr.mxu0 0.0
        %1429 = vmatpush1.msra.mxu0 0.0
        %1430 = vmatprep.subr.mxu0 0.0
        %1431 = vmatpush1.msra.mxu0 0.0
        %1432 = vmatprep.subr.mxu0 0.0
        %1433 = vmatpush1.msra.mxu0 0.0
        %1434 = vmatprep.subr.mxu0 0.0
        %1435 = vmatpush1.msra.mxu0 0.0
        %1436 = vmatprep.subr.mxu0 0.0
        %1437 = vmatpush1.msra.mxu0 0.0
        %1438 = vmatprep.subr.mxu0 0.0
        %1439 = vmatpush1.msra.mxu0 0.0
        %1440 = vmatprep.subr.mxu0 0.0
        %1441 = vmatpush1.msra.mxu0 0.0
        %1442 = vmatprep.subr.mxu0 0.0
        %1443 = vmatpush1.msra.mxu0 0.0
        %1444 = vmatprep.subr.mxu0 0.0
        %1445 = vmatpush1.msra.mxu0 0.0
        %1446 = vmatprep.subr.mxu0 0.0
        %1447 = vmatpush1.msra.mxu0 0.0
        %1448 = vmatprep.subr.mxu0 0.0
        %1449 = vmatpush1.msra.mxu0 0.0
        %1450 = vmatprep.subr.mxu0 0.0
        %1451 = vmatpush1.msra.mxu0 0.0
        %1452 = vmatprep.subr.mxu0 0.0
        %1453 = vmatpush1.msra.mxu0 0.0
        %1454 = vmatprep.subr.mxu0 0.0
        %1455 = vmatpush1.msra.mxu0 0.0
        %1456 = vmatprep.subr.mxu0 0.0
        %1457 = vmatpush1.msra.mxu0 0.0
        %1458 = vmatprep.subr.mxu0 0.0
        %1459 = vmatpush1.msra.mxu0 0.0
        %1460 = vmatprep.subr.mxu0 0.0
        %1461 = vmatpush1.msra.mxu0 0.0
        %1462 = vmatprep.subr.mxu0 0.0
        %1463 = vmatpush1.msra.mxu0 0.0
        %1464 = vmatprep.mubr.f32.mxu0 0.0
        %1465 = vmatmul.mubr.f32.gmra.mrb[0].mxu0 %v1398
        %v1466 = vpop.f32.mrb[0].mxu0
        %v1467 = vadd.f32 0.0, %v1466
        %v1468 = vpop.f32.mrb[0].mxu0
        %v1469 = vadd.f32 0.0, %v1468
        %1470 = vdwg.mxu0
        %v1473 = vrot.slane %v1467, 3
        %v1474 = vrot.slane %v1469, 3
        %v1477 = vadd.f32 %v839, %v1473
        %v1478 = vadd.f32 %v840, %v1474
        %v1479 = vxor.u32 %v1477, 2147483648
        %v1480 = vmul.f32 %v1479, 1.442695
        %v1481 = vpow.pop %v1480
        %v1482 = vadd.f32 %v1481, 1.0
        %v1483 = vrcp.pop %v1482
        %v1484 = vmul.f32 1.0, %v1483
        %v1485 = vtanh.pop %v1478
        %v1486 = vxor.u32 %v1478, 2147483648
        %v1487 = vmul.f32 %v1486, 1.442695
        %v1488 = vpow.pop %v1487
        %v1489 = vadd.f32 %v1488, 1.0
        %v1490 = vrcp.pop %v1489
        %v1491 = vmul.f32 1.0, %v1490
        %v1493 = vrot.slane %v1391, 7
        %v1495 = vmul.f32 %v1484, %v1493
        %v1496 = vmul.f32 %v1484, %v1485
        %1498 = vrot.lane.b32.xlu0 %v1496, 64
        %v1499 = vpop.permute.xlu0 %1498
        %v1501 = vadd.f32 %v1495, %v1499
        %v1502 = vtanh.pop %v1501
        %v1503 = vmul.f32 %v1491, %v1502
        %v1505 = vrot.slane %v1503, 5
        %1506 = vrot.lane.b32.xlu0 %v1505, 64
        %v1507 = vpop.permute.xlu0 %1506
        %v1508 = vsel %vm637, %v1507, 0
        %1510 = vmatprep.subr.mxu0 %v842
        %1511 = vmatpush1.msra.mxu0 %v841
        %1512 = vmatprep.subr.mxu0 %v844
        %1513 = vmatpush1.msra.mxu0 %v843
        %1514 = vmatprep.subr.mxu0 %v846
        %1515 = vmatpush1.msra.mxu0 %v845
        %1516 = vmatprep.subr.mxu0 %v848
        %1517 = vmatpush1.msra.mxu0 %v847
        %1518 = vmatprep.subr.mxu0 %v850
        %1519 = vmatpush1.msra.mxu0 %v849
        %1520 = vmatprep.subr.mxu0 %v852
        %1521 = vmatpush1.msra.mxu0 %v851
        %1522 = vmatprep.subr.mxu0 %v854
        %1523 = vmatpush1.msra.mxu0 %v853
        %1524 = vmatprep.subr.mxu0 %v856
        %1525 = vmatpush1.msra.mxu0 %v855
        %1526 = vmatprep.subr.mxu0 0.0
        %1527 = vmatpush1.msra.mxu0 0.0
        %1528 = vmatprep.subr.mxu0 0.0
        %1529 = vmatpush1.msra.mxu0 0.0
        %1530 = vmatprep.subr.mxu0 0.0
        %1531 = vmatpush1.msra.mxu0 0.0
        %1532 = vmatprep.subr.mxu0 0.0
        %1533 = vmatpush1.msra.mxu0 0.0
        %1534 = vmatprep.subr.mxu0 0.0
        %1535 = vmatpush1.msra.mxu0 0.0
        %1536 = vmatprep.subr.mxu0 0.0
        %1537 = vmatpush1.msra.mxu0 0.0
        %1538 = vmatprep.subr.mxu0 0.0
        %1539 = vmatpush1.msra.mxu0 0.0
        %1540 = vmatprep.subr.mxu0 0.0
        %1541 = vmatpush1.msra.mxu0 0.0
        %1542 = vmatprep.subr.mxu0 0.0
        %1543 = vmatpush1.msra.mxu0 0.0
        %1544 = vmatprep.subr.mxu0 0.0
        %1545 = vmatpush1.msra.mxu0 0.0
        %1546 = vmatprep.subr.mxu0 0.0
        %1547 = vmatpush1.msra.mxu0 0.0
        %1548 = vmatprep.subr.mxu0 0.0
        %1549 = vmatpush1.msra.mxu0 0.0
        %1550 = vmatprep.subr.mxu0 0.0
        %1551 = vmatpush1.msra.mxu0 0.0
        %1552 = vmatprep.subr.mxu0 0.0
        %1553 = vmatpush1.msra.mxu0 0.0
        %1554 = vmatprep.subr.mxu0 0.0
        %1555 = vmatpush1.msra.mxu0 0.0
        %1556 = vmatprep.subr.mxu0 0.0
        %1557 = vmatpush1.msra.mxu0 0.0
        %1558 = vmatprep.subr.mxu0 0.0
        %1559 = vmatpush1.msra.mxu0 0.0
        %1560 = vmatprep.subr.mxu0 0.0
        %1561 = vmatpush1.msra.mxu0 0.0
        %1562 = vmatprep.subr.mxu0 0.0
        %1563 = vmatpush1.msra.mxu0 0.0
        %1564 = vmatprep.subr.mxu0 0.0
        %1565 = vmatpush1.msra.mxu0 0.0
        %1566 = vmatprep.subr.mxu0 0.0
        %1567 = vmatpush1.msra.mxu0 0.0
        %1568 = vmatprep.subr.mxu0 0.0
        %1569 = vmatpush1.msra.mxu0 0.0
        %1570 = vmatprep.subr.mxu0 0.0
        %1571 = vmatpush1.msra.mxu0 0.0
        %1572 = vmatprep.subr.mxu0 0.0
        %1573 = vmatpush1.msra.mxu0 0.0
        %1574 = vmatprep.mubr.f32.mxu0 0.0
        %1575 = vmatmul.mubr.f32.gmra.mrb[0].mxu0 %v1508
        %v1576 = vpop.f32.mrb[0].mxu0
        %v1577 = vadd.f32 0.0, %v1576
        %v1578 = vpop.f32.mrb[0].mxu0
        %v1579 = vadd.f32 0.0, %v1578
        %1580 = vdwg.mxu0
        %v1583 = vrot.slane %v1577, 2
        %v1584 = vrot.slane %v1579, 2
        %v1587 = vadd.f32 %v839, %v1583
        %v1588 = vadd.f32 %v840, %v1584
        %v1589 = vxor.u32 %v1587, 2147483648
        %v1590 = vmul.f32 %v1589, 1.442695
        %v1591 = vpow.pop %v1590
        %v1592 = vadd.f32 %v1591, 1.0
        %v1593 = vrcp.pop %v1592
        %v1594 = vmul.f32 1.0, %v1593
        %v1595 = vtanh.pop %v1588
        %v1596 = vxor.u32 %v1588, 2147483648
        %v1597 = vmul.f32 %v1596, 1.442695
        %v1598 = vpow.pop %v1597
        %v1599 = vadd.f32 %v1598, 1.0
        %v1600 = vrcp.pop %v1599
        %v1601 = vmul.f32 1.0, %v1600
        %v1603 = vrot.slane %v1501, 7
        %v1605 = vmul.f32 %v1594, %v1603
        %v1606 = vmul.f32 %v1594, %v1595
        %1608 = vrot.lane.b32.xlu0 %v1606, 64
        %v1609 = vpop.permute.xlu0 %1608
        %v1611 = vadd.f32 %v1605, %v1609
        %v1612 = vtanh.pop %v1611
        %v1613 = vmul.f32 %v1601, %v1612
        %v1615 = vrot.slane %v1613, 6
        %1616 = vrot.lane.b32.xlu0 %v1615, 64
        %v1617 = vpop.permute.xlu0 %1616
        %v1618 = vsel %vm637, %v1617, 0
        %1620 = vmatprep.subr.mxu0 %v842
        %1621 = vmatpush1.msra.mxu0 %v841
        %1622 = vmatprep.subr.mxu0 %v844
        %1623 = vmatpush1.msra.mxu0 %v843
        %1624 = vmatprep.subr.mxu0 %v846
        %1625 = vmatpush1.msra.mxu0 %v845
        %1626 = vmatprep.subr.mxu0 %v848
        %1627 = vmatpush1.msra.mxu0 %v847
        %1628 = vmatprep.subr.mxu0 %v850
        %1629 = vmatpush1.msra.mxu0 %v849
        %1630 = vmatprep.subr.mxu0 %v852
        %1631 = vmatpush1.msra.mxu0 %v851
        %1632 = vmatprep.subr.mxu0 %v854
        %1633 = vmatpush1.msra.mxu0 %v853
        %1634 = vmatprep.subr.mxu0 %v856
        %1635 = vmatpush1.msra.mxu0 %v855
        %1636 = vmatprep.subr.mxu0 0.0
        %1637 = vmatpush1.msra.mxu0 0.0
        %1638 = vmatprep.subr.mxu0 0.0
        %1639 = vmatpush1.msra.mxu0 0.0
        %1640 = vmatprep.subr.mxu0 0.0
        %1641 = vmatpush1.msra.mxu0 0.0
        %1642 = vmatprep.subr.mxu0 0.0
        %1643 = vmatpush1.msra.mxu0 0.0
        %1644 = vmatprep.subr.mxu0 0.0
        %1645 = vmatpush1.msra.mxu0 0.0
        %1646 = vmatprep.subr.mxu0 0.0
        %1647 = vmatpush1.msra.mxu0 0.0
        %1648 = vmatprep.subr.mxu0 0.0
        %1649 = vmatpush1.msra.mxu0 0.0
        %1650 = vmatprep.subr.mxu0 0.0
        %1651 = vmatpush1.msra.mxu0 0.0
        %1652 = vmatprep.subr.mxu0 0.0
        %1653 = vmatpush1.msra.mxu0 0.0
        %1654 = vmatprep.subr.mxu0 0.0
        %1655 = vmatpush1.msra.mxu0 0.0
        %1656 = vmatprep.subr.mxu0 0.0
        %1657 = vmatpush1.msra.mxu0 0.0
        %1658 = vmatprep.subr.mxu0 0.0
        %1659 = vmatpush1.msra.mxu0 0.0
        %1660 = vmatprep.subr.mxu0 0.0
        %1661 = vmatpush1.msra.mxu0 0.0
        %1662 = vmatprep.subr.mxu0 0.0
        %1663 = vmatpush1.msra.mxu0 0.0
        %1664 = vmatprep.subr.mxu0 0.0
        %1665 = vmatpush1.msra.mxu0 0.0
        %1666 = vmatprep.subr.mxu0 0.0
        %1667 = vmatpush1.msra.mxu0 0.0
        %1668 = vmatprep.subr.mxu0 0.0
        %1669 = vmatpush1.msra.mxu0 0.0
        %1670 = vmatprep.subr.mxu0 0.0
        %1671 = vmatpush1.msra.mxu0 0.0
        %1672 = vmatprep.subr.mxu0 0.0
        %1673 = vmatpush1.msra.mxu0 0.0
        %1674 = vmatprep.subr.mxu0 0.0
        %1675 = vmatpush1.msra.mxu0 0.0
        %1676 = vmatprep.subr.mxu0 0.0
        %1677 = vmatpush1.msra.mxu0 0.0
        %1678 = vmatprep.subr.mxu0 0.0
        %1679 = vmatpush1.msra.mxu0 0.0
        %1680 = vmatprep.subr.mxu0 0.0
        %1681 = vmatpush1.msra.mxu0 0.0
        %1682 = vmatprep.subr.mxu0 0.0
        %1683 = vmatpush1.msra.mxu0 0.0
        %1684 = vmatprep.mubr.f32.mxu0 0.0
        %1685 = vmatmul.mubr.f32.gmra.mrb[0].mxu0 %v1618
        %v1686 = vpop.f32.mrb[0].mxu0
        %v1687 = vadd.f32 0.0, %v1686
        %v1688 = vpop.f32.mrb[0].mxu0
        %v1689 = vadd.f32 0.0, %v1688
        %1690 = vdwg.mxu0
        %v1693 = vrot.slane %v1687, 1
        %v1694 = vrot.slane %v1689, 1
        %v1697 = vadd.f32 %v839, %v1693
        %v1698 = vadd.f32 %v840, %v1694
        %v1699 = vxor.u32 %v1697, 2147483648
        %v1700 = vmul.f32 %v1699, 1.442695
        %v1701 = vpow.pop %v1700
        %v1702 = vadd.f32 %v1701, 1.0
        %v1703 = vrcp.pop %v1702
        %v1704 = vmul.f32 1.0, %v1703
        %v1705 = vtanh.pop %v1698
        %v1706 = vxor.u32 %v1698, 2147483648
        %v1707 = vmul.f32 %v1706, 1.442695
        %v1708 = vpow.pop %v1707
        %v1709 = vadd.f32 %v1708, 1.0
        %v1710 = vrcp.pop %v1709
        %v1711 = vmul.f32 1.0, %v1710
        %v1713 = vrot.slane %v1611, 7
        %v1715 = vmul.f32 %v1704, %v1713
        %v1716 = vmul.f32 %v1704, %v1705
        %1718 = vrot.lane.b32.xlu0 %v1716, 64
        %v1719 = vpop.permute.xlu0 %1718
        %v1721 = vadd.f32 %v1715, %v1719
        %v1722 = vtanh.pop %v1721
        %v1723 = vmul.f32 %v1711, %v1722
        %vm1724 = vcmask 1040384
        %v1725 = vsel %vm1724, %v954, %v1063
        %vm1726 = vcmask 1041408
        %v1727 = vsel %vm1726, %v1725, %v1173
        %vm1728 = vcmask 1042432
        %v1729 = vsel %vm1728, %v1727, %v1283
        %vm1730 = vcmask 1043456
        %v1731 = vsel %vm1730, %v1729, %v1393
        %vm1732 = vcmask 1044480
        %v1733 = vsel %vm1732, %v1731, %v1503
        %vm1734 = vcmask 1045504
        %v1735 = vsel %vm1734, %v1733, %v1613
        %vm1736 = vcmask 1046528
        %v1737 = vsel %vm1736, %v1735, %v1723
        %v1738 = vld [vmem:[%s9] sm:$0xff]
        %v1739 = vld [vmem:[%s9 + $0x8] sm:$0xff]
        %v1740 = vld [vmem:[%s9 + $0x10] sm:$0xff]
        %v1741 = vld [vmem:[%s9 + $0x18] sm:$0xff]
        %v1742 = vld [vmem:[%s9 + $0x20] sm:$0xff]
        %v1743 = vld [vmem:[%s9 + $0x28] sm:$0xff]
        %v1744 = vld [vmem:[%s9 + $0x30] sm:$0xff]
        %v1745 = vld [vmem:[%s9 + $0x38] sm:$0xff]
        %v1746 = vld [vmem:[%s10] sm:$0x1]
        %v1748 = vlaneseq
        %v1749 = vshrl.u32 %v1748, 7
        %v1750 = vsub.s32 0, %v1749
        %v1751 = vrot.slane %v1746, %v1750
        %1754 = vrot.lane.b32.xlu0 %v1737, 64
        %v1755 = vpop.permute.xlu0 %1754
        %v1756 = vsel %vm637, %v1755, 0
        %1758 = vmatprep.subr.mxu0 0.0
        %1759 = vmatpush1.msra.mxu0 %v1738
        %1760 = vmatprep.subr.mxu0 0.0
        %1761 = vmatpush1.msra.mxu0 %v1739
        %1762 = vmatprep.subr.mxu0 0.0
        %1763 = vmatpush1.msra.mxu0 %v1740
        %1764 = vmatprep.subr.mxu0 0.0
        %1765 = vmatpush1.msra.mxu0 %v1741
        %1766 = vmatprep.subr.mxu0 0.0
        %1767 = vmatpush1.msra.mxu0 %v1742
        %1768 = vmatprep.subr.mxu0 0.0
        %1769 = vmatpush1.msra.mxu0 %v1743
        %1770 = vmatprep.subr.mxu0 0.0
        %1771 = vmatpush1.msra.mxu0 %v1744
        %1772 = vmatprep.subr.mxu0 0.0
        %1773 = vmatpush1.msra.mxu0 %v1745
        %1774 = vmatprep.subr.mxu0 0.0
        %1775 = vmatpush1.msra.mxu0 0.0
        %1776 = vmatprep.subr.mxu0 0.0
        %1777 = vmatpush1.msra.mxu0 0.0
        %1778 = vmatprep.subr.mxu0 0.0
        %1779 = vmatpush1.msra.mxu0 0.0
        %1780 = vmatprep.subr.mxu0 0.0
        %1781 = vmatpush1.msra.mxu0 0.0
        %1782 = vmatprep.subr.mxu0 0.0
        %1783 = vmatpush1.msra.mxu0 0.0
        %1784 = vmatprep.subr.mxu0 0.0
        %1785 = vmatpush1.msra.mxu0 0.0
        %1786 = vmatprep.subr.mxu0 0.0
        %1787 = vmatpush1.msra.mxu0 0.0
        %1788 = vmatprep.subr.mxu0 0.0
        %1789 = vmatpush1.msra.mxu0 0.0
        %1790 = vmatprep.subr.mxu0 0.0
        %1791 = vmatpush1.msra.mxu0 0.0
        %1792 = vmatprep.subr.mxu0 0.0
        %1793 = vmatpush1.msra.mxu0 0.0
        %1794 = vmatprep.subr.mxu0 0.0
        %1795 = vmatpush1.msra.mxu0 0.0
        %1796 = vmatprep.subr.mxu0 0.0
        %1797 = vmatpush1.msra.mxu0 0.0
        %1798 = vmatprep.subr.mxu0 0.0
        %1799 = vmatpush1.msra.mxu0 0.0
        %1800 = vmatprep.subr.mxu0 0.0
        %1801 = vmatpush1.msra.mxu0 0.0
        %1802 = vmatprep.subr.mxu0 0.0
        %1803 = vmatpush1.msra.mxu0 0.0
        %1804 = vmatprep.subr.mxu0 0.0
        %1805 = vmatpush1.msra.mxu0 0.0
        %1806 = vmatprep.subr.mxu0 0.0
        %1807 = vmatpush1.msra.mxu0 0.0
        %1808 = vmatprep.subr.mxu0 0.0
        %1809 = vmatpush1.msra.mxu0 0.0
        %1810 = vmatprep.subr.mxu0 0.0
        %1811 = vmatpush1.msra.mxu0 0.0
        %1812 = vmatprep.subr.mxu0 0.0
        %1813 = vmatpush1.msra.mxu0 0.0
        %1814 = vmatprep.subr.mxu0 0.0
        %1815 = vmatpush1.msra.mxu0 0.0
        %1816 = vmatprep.subr.mxu0 0.0
        %1817 = vmatpush1.msra.mxu0 0.0
        %1818 = vmatprep.subr.mxu0 0.0
        %1819 = vmatpush1.msra.mxu0 0.0
        %1820 = vmatprep.subr.mxu0 0.0
        %1821 = vmatpush1.msra.mxu0 0.0
        %1822 = vmatprep.mubr.f32.mxu0 0.0
        %1823 = vmatmul.mubr.f32.gmra.mrb[0].mxu0 %v1756
        %v1824 = vpop.f32.mrb[0].mxu0
        %v1825 = vadd.f32 %v1751, %v1824
        %v1826 = vpop.f32.mrb[0].mxu0
        %1827 = vdwg.mxu0
        %v1828 = vmax.f32 %v1825, 0.0
        %v1829 = vld [vmem:[%s11] sm:$0xff]
        %v1830 = vld [vmem:[%s11 + $0x8] sm:$0xff]
        %v1831 = vld [vmem:[%s11 + $0x10] sm:$0xff]
        %v1832 = vld [vmem:[%s11 + $0x18] sm:$0xff]
        %v1833 = vld [vmem:[%s12] sm:$0x1]
        %v1835 = vlaneseq
        %v1836 = vshrl.u32 %v1835, 7
        %v1837 = vsub.s32 0, %v1836
        %v1838 = vrot.slane %v1833, %v1837
        %vm1840 = vcmask 261120
        %v1842 = vsel %vm1840, %v1828, 0
        %1844 = vmatprep.subr.mxu0 0.0
        %1845 = vmatpush1.msra.mxu0 %v1829
        %1846 = vmatprep.subr.mxu0 0.0
        %1847 = vmatpush1.msra.mxu0 %v1830
        %1848 = vmatprep.subr.mxu0 0.0
        %1849 = vmatpush1.msra.mxu0 %v1831
        %1850 = vmatprep.subr.mxu0 0.0
        %1851 = vmatpush1.msra.mxu0 %v1832
        %1852 = vmatprep.subr.mxu0 0.0
        %1853 = vmatpush1.msra.mxu0 0.0
        %1854 = vmatprep.subr.mxu0 0.0
        %1855 = vmatpush1.msra.mxu0 0.0
        %1856 = vmatprep.subr.mxu0 0.0
        %1857 = vmatpush1.msra.mxu0 0.0
        %1858 = vmatprep.subr.mxu0 0.0
        %1859 = vmatpush1.msra.mxu0 0.0
        %1860 = vmatprep.subr.mxu0 0.0
        %1861 = vmatpush1.msra.mxu0 0.0
        %1862 = vmatprep.subr.mxu0 0.0
        %1863 = vmatpush1.msra.mxu0 0.0
        %1864 = vmatprep.subr.mxu0 0.0
        %1865 = vmatpush1.msra.mxu0 0.0
        %1866 = vmatprep.subr.mxu0 0.0
        %1867 = vmatpush1.msra.mxu0 0.0
        %1868 = vmatprep.subr.mxu0 0.0
        %1869 = vmatpush1.msra.mxu0 0.0
        %1870 = vmatprep.subr.mxu0 0.0
        %1871 = vmatpush1.msra.mxu0 0.0
        %1872 = vmatprep.subr.mxu0 0.0
        %1873 = vmatpush1.msra.mxu0 0.0
        %1874 = vmatprep.subr.mxu0 0.0
        %1875 = vmatpush1.msra.mxu0 0.0
        %1876 = vmatprep.subr.mxu0 0.0
        %1877 = vmatpush1.msra.mxu0 0.0
        %1878 = vmatprep.subr.mxu0 0.0
        %1879 = vmatpush1.msra.mxu0 0.0
        %1880 = vmatprep.subr.mxu0 0.0
        %1881 = vmatpush1.msra.mxu0 0.0
        %1882 = vmatprep.subr.mxu0 0.0
        %1883 = vmatpush1.msra.mxu0 0.0
        %1884 = vmatprep.subr.mxu0 0.0
        %1885 = vmatpush1.msra.mxu0 0.0
        %1886 = vmatprep.subr.mxu0 0.0
        %1887 = vmatpush1.msra.mxu0 0.0
        %1888 = vmatprep.subr.mxu0 0.0
        %1889 = vmatpush1.msra.mxu0 0.0
        %1890 = vmatprep.subr.mxu0 0.0
        %1891 = vmatpush1.msra.mxu0 0.0
        %1892 = vmatprep.subr.mxu0 0.0
        %1893 = vmatpush1.msra.mxu0 0.0
        %1894 = vmatprep.subr.mxu0 0.0
        %1895 = vmatpush1.msra.mxu0 0.0
        %1896 = vmatprep.subr.mxu0 0.0
        %1897 = vmatpush1.msra.mxu0 0.0
        %1898 = vmatprep.subr.mxu0 0.0
        %1899 = vmatpush1.msra.mxu0 0.0
        %1900 = vmatprep.subr.mxu0 0.0
        %1901 = vmatpush1.msra.mxu0 0.0
        %1902 = vmatprep.subr.mxu0 0.0
        %1903 = vmatpush1.msra.mxu0 0.0
        %1904 = vmatprep.subr.mxu0 0.0
        %1905 = vmatpush1.msra.mxu0 0.0
        %1906 = vmatprep.subr.mxu0 0.0
        %1907 = vmatpush1.msra.mxu0 0.0
        %1908 = vmatprep.mubr.f32.mxu0 0.0
        %1909 = vmatmul.mubr.f32.gmra.mrb[0].mxu0 %v1842
        %v1910 = vpop.f32.mrb[0].mxu0
        %v1911 = vadd.f32 %v1838, %v1910
        %v1912 = vpop.f32.mrb[0].mxu0
        %1913 = vdwg.mxu0
        %v1914 = vtanh.pop %v1911
        %1915 = vst [vmem:[%s536] sm:$0xff] %v1914
        %s1916 = sand.u32 %s319, 1
        %s1917 = scalar_lea.sflag [#allocation4], %s1916
        %s1918 = sand.u32 %s319, 1
        %s1919 = smul.addr %s1918, 8
        %s1920 = scalar_lea.vmem [#allocation14], %s1919
        // Predicated region
        $region101: #{tpu_custom_call.1} parent=71 // pred_check
          %p1921 = pneg %p329
        $region102: #{tpu_custom_call.1} parent=71 // pred_check_branch
          %1923 = sbr.rel (%p1921) target = $region104
        $region103: #{tpu_custom_call.1} parent=71 // pred_region
          %s1925 = ssub.s32 128, 128
          %1926 = vsyncadd %s1917, %s1925
          %s1927 = smul.addr %s33, 128
          %s1928 = scalar_lea.hbm %s13, %s1927
          %s1930 = sshll.u32 %s1920, 4
          %s1931 = int_to_ptr.vmem [resolvable:$true] %s1930
          %1933 = dma.vmem_to_hbm [thread:$0]  %s1931, 128, %s1928, %s1917
        $region104: #{tpu_custom_call.1} parent=71 // pred_fallthru
          _
      $region72: #{tpu_custom_call.1} parent=5 // pred_fallthru
        _
      %p1934 = scmp.le.s32.totalorder 2, %s28
      // Predicated region
      $region105: #{tpu_custom_call.1} parent=5 // pred_check
        %p1935 = pneg %p1934
      $region106: #{tpu_custom_call.1} parent=5 // pred_check_branch
        %1937 = sbr.rel (%p1935) target = $region108
      $region107: #{tpu_custom_call.1} parent=5 // pred_region
        %s1938 = ssub.s32 %s28, 2
        // Predicated region
        $region109: #{tpu_custom_call.1} parent=107 // pred_check
          %p1939 = pneg %p335
        $region110: #{tpu_custom_call.1} parent=107 // pred_check_branch
          %1941 = sbr.rel (%p1939) target = $region112
        $region111: #{tpu_custom_call.1} parent=107 // pred_region
          %s1942 = sand.u32 %s320, 1
          %s1943 = scalar_lea.sflag [#allocation4], %s1942
          %s1944 = sand.u32 %s320, 1
          %s1945 = smul.addr %s1944, 8
          %s1946 = scalar_lea.vmem [#allocation14], %s1945
          %1947 = dma.done %s1943, 128
        $region112: #{tpu_custom_call.1} parent=107 // pred_fallthru
          _
      $region108: #{tpu_custom_call.1} parent=5 // pred_fallthru
        _
    $region6: #{tpu_custom_call.1} parent=1 // loop_footer
      %s32 = sadd.s32 1, %s28
    $region7: #{tpu_custom_call.1} parent=1 // loop_footer_branch
      %27 = sbr.rel target = $region3
    $region8: #{tpu_custom_call.1} parent=1 // loop_exit
      _
    %1948 = vsyncpa [#allocation3], 1
    %s1949 = scalar_lea.sflag [#allocation3], 1
    %1950 = vsyncpa %s1949, 1
    %1951 = vsyncpa [#allocation6], 1
    %1952 = vsyncpa [#allocation9], 1
    %1953 = vsyncpa [#allocation12], 1
    %1954 = vsyncpa [#allocation4], 1
    %s1955 = scalar_lea.sflag [#allocation4], 1
    %1956 = vsyncpa %s1955, 1

</llo_original>
